<compile_context>
chip_gen: v7x
topology: tpu7x:2x2x1
jax: 0.10.0
libtpu: 0.0.40
codegen_flags: <defaults>
</compile_context>

<pallas_src>
import jax
import jax.numpy as jnp
from jax.experimental import pallas as pl
from jax.experimental.pallas import tpu as pltpu

_EPS = 1e-5


# ----------------------------------------------------------------------------
# Kernel: fused 1x1x1 conv (BN pre-folded into W/b) + bias + ReLU.
# ----------------------------------------------------------------------------
def _conv1x1_bn_relu_kernel(x_ref, w_ref, b_ref, o_ref):
    # x_ref: (1, Cin, TS)   activations, spatial on the lane axis
    # w_ref: (Cout, Cin)    BN-folded conv weight
    # b_ref: (Cout, 1)      BN-folded bias (broadcast along lanes)
    # o_ref: (1, Cout, TS)
    y = jnp.dot(w_ref[...], x_ref[0], preferred_element_type=jnp.float32)
    o_ref[0] = jnp.maximum(y + b_ref[...], 0.0)


def _pick_spatial_tile(S, cap=2048):
    """Largest 128-multiple divisor of S that is <= cap (or full S)."""
    if S % 128 != 0 or S <= cap:
        return S
    ts = (cap // 128) * 128
    while S % ts != 0:
        ts -= 128
    return ts


def down_channel_3d(x, w, b, gamma, beta, rm, rv, eps=_EPS):
    """x: (N, Cin, D, H, W) NCDHW; w: (Cout, Cin); b/gamma/beta/rm/rv: (Cout,)."""
    N, Cin, D, H, W = x.shape
    Cout = w.shape[0]
    S = D * H * W

    # Fold eval-mode BatchNorm into the conv weight / bias.
    scale = gamma / jnp.sqrt(rv + eps)                       # (Cout,)
    w_f = (w * scale[:, None]).astype(jnp.float32)           # (Cout, Cin)
    b_f = (beta + (b - rm) * scale).reshape(Cout, 1).astype(jnp.float32)

    xr = x.reshape(N, Cin, S)                                # view, no transpose
    ts = _pick_spatial_tile(S)
    grid = (N, S // ts)

    out = pl.pallas_call(
        _conv1x1_bn_relu_kernel,
        out_shape=jax.ShapeDtypeStruct((N, Cout, S), jnp.float32),
        grid=grid,
        in_specs=[
            pl.BlockSpec((1, Cin, ts), lambda n, s: (n, 0, s)),
            pl.BlockSpec((Cout, Cin), lambda n, s: (0, 0)),
            pl.BlockSpec((Cout, 1), lambda n, s: (0, 0)),
        ],
        out_specs=pl.BlockSpec((1, Cout, ts), lambda n, s: (n, 0, s)),
        compiler_params=pltpu.CompilerParams(
            dimension_semantics=("parallel", "parallel")),
    )(xr, w_f, b_f)
    return out.reshape(N, Cout, D, H, W)


# ----------------------------------------------------------------------------
# Pure-JAX reference (eval-mode BN), for the numerical check.
# ----------------------------------------------------------------------------
def reference(x, w, b, gamma, beta, rm, rv, eps=_EPS):
    y = jnp.einsum('oc,ncdhw->nodhw', w, x) + b[None, :, None, None, None]
    y = (y - rm[None, :, None, None, None]) / jnp.sqrt(
        rv[None, :, None, None, None] + eps)
    y = gamma[None, :, None, None, None] * y + beta[None, :, None, None, None]
    return jnp.maximum(y, 0.0)


# ----------------------------------------------------------------------------
# Deterministic parameter init (shapes from the PyTorch __init__)
# ----------------------------------------------------------------------------
def init_params(key, cin, cout):
    ks = jax.random.split(key, 7)
    r = lambda k, s, sc=0.1: (sc * jax.random.normal(k, s)).astype(jnp.float32)
    return dict(
        w=r(ks[0], (cout, cin)),                # Conv3d(k=1) weight, squeezed
        b=r(ks[1], (cout,)),
        gamma=(1.0 + 0.1 * jax.random.normal(ks[2], (cout,))).astype(jnp.float32),
        beta=r(ks[3], (cout,)),
        rm=r(ks[4], (cout,)),
        rv=(0.5 + jax.random.uniform(ks[5], (cout,))).astype(jnp.float32),
    )


if __name__ == "__main__":
    key = jax.random.PRNGKey(0)
    kx, kp = jax.random.split(key)

    N, Cin, Cout = 2, 48, 24
    D = H = W = 16

    x = jax.random.normal(kx, (N, Cin, D, H, W), jnp.float32)  # PyTorch NCDHW
    p = init_params(kp, Cin, Cout)

    fn = jax.jit(lambda xx: down_channel_3d(
        xx, p["w"], p["b"], p["gamma"], p["beta"], p["rm"], p["rv"]))
    out = jax.block_until_ready(fn(x))

    ref = reference(x, p["w"], p["b"], p["gamma"], p["beta"], p["rm"], p["rv"])
    err = float(jnp.max(jnp.abs(out - ref)))
    assert out.shape == (N, Cout, D, H, W), out.shape
    assert err < 1e-3, f"max abs err too large: {err}"

    print("KERNEL_OK")
</pallas_src>

<mosaic_0001>
module attributes {stable_mosaic.version = 11 : i64} {
  func.func @_conv1x1_bn_relu_kernel(%arg0: i32, %arg1: i32, %arg2: memref<1x48x2048xf32, #tpu.memory_space<vmem>>, %arg3: memref<24x48xf32, #tpu.memory_space<vmem>>, %arg4: memref<24x1xf32, #tpu.memory_space<vmem>>, %arg5: memref<1x24x2048xf32, #tpu.memory_space<vmem>>) attributes {dimension_semantics = [#tpu.dimension_semantics<parallel>, #tpu.dimension_semantics<parallel>], iteration_bounds = array<i64: 2, 2>, scalar_prefetch = 0 : i64, scratch_operands = 0 : i64, tpu.core_type = #tpu.core_type<tc>, window_params = [{transform_indices = @transform_0, window_bounds = array<i64: 1, 48, 2048>}, {pipeline_mode = #tpu.pipeline_mode<synchronous>, transform_indices = @transform_1, window_bounds = array<i64: 24, 48>}, {pipeline_mode = #tpu.pipeline_mode<synchronous>, transform_indices = @transform_2, window_bounds = array<i64: 24, 1>}, {transform_indices = @transform_3, window_bounds = array<i64: 1, 24, 2048>}]} {
    %c0 = arith.constant 0 : index
    %c0_0 = arith.constant 0 : index
    %0 = vector.load %arg3[%c0, %c0_0] : memref<24x48xf32, #tpu.memory_space<vmem>>, vector<24x48xf32>
    %c0_1 = arith.constant 0 : index
    %c0_2 = arith.constant 0 : index
    %c0_3 = arith.constant 0 : index
    %1 = vector.load %arg2[%c0_1, %c0_2, %c0_3] : memref<1x48x2048xf32, #tpu.memory_space<vmem>>, vector<1x48x2048xf32>
    %2 = vector.shape_cast %1 : vector<1x48x2048xf32> to vector<48x2048xf32>
    %cst = arith.constant dense<0.000000e+00> : vector<24x2048xf32>
    %3 = tpu.matmul %0, %2, %cst {dimension_numbers = #tpu.dot_dimension_numbers<[1], [0], [0], [1], [0, 0, 1, 1], [], []>} : vector<24x48xf32>, vector<48x2048xf32>, vector<24x2048xf32> -> vector<24x2048xf32>
    %c0_4 = arith.constant 0 : index
    %c0_5 = arith.constant 0 : index
    %4 = vector.load %arg4[%c0_4, %c0_5] : memref<24x1xf32, #tpu.memory_space<vmem>>, vector<24x1xf32>
    %5 = vector.broadcast %4 : vector<24x1xf32> to vector<24x2048xf32>
    %6 = arith.addf %3, %5 : vector<24x2048xf32>
    %cst_6 = arith.constant 0.000000e+00 : f32
    %7 = vector.broadcast %cst_6 : f32 to vector<24x2048xf32>
    %8 = arith.maximumf %6, %7 : vector<24x2048xf32>
    %c0_7 = arith.constant 0 : index
    %c0_8 = arith.constant 0 : index
    %c0_9 = arith.constant 0 : index
    %9 = vector.load %arg5[%c0_7, %c0_8, %c0_9] : memref<1x24x2048xf32, #tpu.memory_space<vmem>>, vector<1x24x2048xf32>
    %10 = vector.shape_cast %9 : vector<1x24x2048xf32> to vector<24x2048xf32>
    %11 = vector.shape_cast %8 : vector<24x2048xf32> to vector<1x24x2048xf32>
    tpu.vector_store %arg5[%c0_7, %c0_8, %c0_9], %11 {strides = array<i32>} : memref<1x24x2048xf32, #tpu.memory_space<vmem>>, vector<1x24x2048xf32>,
    return
  }
  func.func @transform_0(%arg0: i32, %arg1: i32) -> (i32, i32, i32) {
    %c0_i32 = arith.constant 0 : i32
    %c0_i32_0 = arith.constant 0 : i32
    return %arg0, %c0_i32, %arg1 : i32, i32, i32
  }
  func.func @transform_1(%arg0: i32, %arg1: i32) -> (i32, i32) {
    %c0_i32 = arith.constant 0 : i32
    %c0_i32_0 = arith.constant 0 : i32
    %c0_i32_1 = arith.constant 0 : i32
    return %c0_i32, %c0_i32_0 : i32, i32
  }
  func.func @transform_2(%arg0: i32, %arg1: i32) -> (i32, i32) {
    %c0_i32 = arith.constant 0 : i32
    %c0_i32_0 = arith.constant 0 : i32
    %c0_i32_1 = arith.constant 0 : i32
    return %c0_i32, %c0_i32_0 : i32, i32
  }
  func.func @transform_3(%arg0: i32, %arg1: i32) -> (i32, i32, i32) {
    %c0_i32 = arith.constant 0 : i32
    %c0_i32_0 = arith.constant 0 : i32
    return %arg0, %c0_i32, %arg1 : i32, i32, i32
  }
}

</mosaic_0001>

<llo_original>
// kernel: _lambda_.1
$region0: #{_lambda_.1}
  #allocation0 [shape = 'u32[]', space=smem, size = 0x4, offset = 0x4, fixed_abs, tag = 'smem constant byte address 0x4 - core index']
  #allocation1 [shape = 'u32[144,128]{1,0:T(1,128)}', space=vmem, size = 0x12000, scoped, tag = 'internal scratch']
  %s0 = inlined_call_operand.vmem [shape: f32[2,48,4096], index: 0, kind: input, shape index: {}]
  %s1 = inlined_call_operand.vmem [shape: f32[24,48], index: 1, kind: input, shape index: {}]
  %s2 = inlined_call_operand.vmem [shape: f32[24,1], index: 2, kind: input, shape index: {}]
  %s3 = inlined_call_operand.vmem [shape: f32[2,24,4096], index: 3, kind: output, shape index: {}]
  %s4 = sld [smem:[#allocation0]]
  $region87: #{_lambda_.1} parent=0
    _
  %s6 = ssub.s32 1, %s4
  %s7 = scalar_select 0, %s6, %s4
  $region1: #{_lambda_.1} parent=0
    #allocation2 [shape = 'u8[786432]{0}', space=vmem, size = 0xc0000, scoped, tag = 'input window, operand 0']
    #allocation3 [shape = 'u8[393216]{0}', space=vmem, size = 0x60000, scoped, tag = 'output window, operand 0']
    loop: start=0, step=1, limit=6
    $region2: #{_lambda_.1} parent=1 // loop_pre_header
      _
    $region3: #{_lambda_.1} parent=1 // loop_header
      %s9 = sphi 0, %s13
      %p10 = scmp.ge.s32.totalorder %s9, 6
      %s16 = sphi 0, %s28
      %s17 = sphi 0, %s24
      %s18 = sphi 0, %s16
      %s19 = sphi 0, %s17
      %s20 = sphi 0, %s18
      %s21 = sphi 0, %s19
      %s33 = sphi 0, %s35
      %s36 = sphi 0, %s33
      %s37 = sphi 0, %s36
      %s53 = sphi 0, %s37
      %s57 = sphi 0, %s57
      %s59 = sphi 0, %s57
      %s60 = sphi 0, %s59
      %s74 = sphi 0, %s60
      %s78 = sphi 0, %s78
      %s80 = sphi 0, %s78
      %s81 = sphi 0, %s80
      %s95 = sphi 0, %s81
      %s103 = sphi 0, %s105
      %s106 = sphi 0, %s103
      %s107 = sphi 0, %s106
      %s123 = sphi 0, %s107
    $region4: #{_lambda_.1} parent=1 // loop_header_branch
      %12 = sbr.rel (%p10) target = $region8
    $region5: #{_lambda_.1} parent=1 // loop_body
      %s14 = ssub.s32 %s9, 1
      %s15 = ssub.s32 %s9, 2
      %s22 = sadd.s32 1, %s17
      %p23 = scmp.ge.s32.totalorder %s22, 2
      %s24 = scalar_select %p23, 0, %s22
      %s25 = sadd.s32 1, %s16
      %s26 = scalar_select %p23, %s25, %s16
      %p27 = scmp.ge.s32.totalorder %s26, 2
      %s28 = scalar_select %p27, 0, %s26
      %s29 = ssub.s32 %s16, %s28
      %s30 = ssub.s32 %s17, %s24
      %s31 = sor.u32 %s29, %s30
      %p32 = scmp.eq.s32.totalorder %s31, 0
      %s34 = sadd.s32 %s33, 1
      %s35 = scalar_select %p32, %s33, %s34
      %p38 = pneg %p32
      %p39 = scmp.eq.s32.totalorder %s9, 3
      %p40 = por %p38, %p39
      %p41 = scmp.ne.s32.totalorder %s33, %s36
      %p42 = scmp.eq.s32.totalorder %s9, 0
      %p43 = por %p41, %p42
      %p44 = scmp.ne.s32.totalorder %s33, %s36
      %p45 = scmp.eq.s32.totalorder %s14, 3
      %p46 = por %p44, %p45
      %p47 = scmp.ne.s32.totalorder %s36, %s37
      %p48 = scmp.eq.s32.totalorder %s14, 0
      %p49 = por %p47, %p48
      %p50 = scmp.ne.s32.totalorder %s36, %s37
      %p51 = scmp.eq.s32.totalorder %s15, 3
      %p52 = por %p50, %p51
      %p54 = scmp.ne.s32.totalorder %s37, %s53
      %p55 = scmp.eq.s32.totalorder %s15, 0
      %p56 = por %p54, %p55
      %s58 = sadd.s32 %s57, 1
      %p61 = scmp.eq.s32.totalorder %s9, 3
      %p62 = scmp.ne.s32.totalorder %s57, %s59
      %p63 = scmp.eq.s32.totalorder %s9, 0
      %p64 = por %p62, %p63
      %p65 = scmp.ne.s32.totalorder %s57, %s59
      %p66 = scmp.eq.s32.totalorder %s14, 3
      %p67 = por %p65, %p66
      %p68 = scmp.ne.s32.totalorder %s59, %s60
      %p69 = scmp.eq.s32.totalorder %s14, 0
      %p70 = por %p68, %p69
      %p71 = scmp.ne.s32.totalorder %s59, %s60
      %p72 = scmp.eq.s32.totalorder %s15, 3
      %p73 = por %p71, %p72
      %p75 = scmp.ne.s32.totalorder %s60, %s74
      %p76 = scmp.eq.s32.totalorder %s15, 0
      %p77 = por %p75, %p76
      %s79 = sadd.s32 %s78, 1
      %p82 = scmp.eq.s32.totalorder %s9, 3
      %p83 = scmp.ne.s32.totalorder %s78, %s80
      %p84 = scmp.eq.s32.totalorder %s9, 0
      %p85 = por %p83, %p84
      %p86 = scmp.ne.s32.totalorder %s78, %s80
      %p87 = scmp.eq.s32.totalorder %s14, 3
      %p88 = por %p86, %p87
      %p89 = scmp.ne.s32.totalorder %s80, %s81
      %p90 = scmp.eq.s32.totalorder %s14, 0
      %p91 = por %p89, %p90
      %p92 = scmp.ne.s32.totalorder %s80, %s81
      %p93 = scmp.eq.s32.totalorder %s15, 3
      %p94 = por %p92, %p93
      %p96 = scmp.ne.s32.totalorder %s81, %s95
      %p97 = scmp.eq.s32.totalorder %s15, 0
      %p98 = por %p96, %p97
      %s99 = ssub.s32 %s16, %s28
      %s100 = ssub.s32 %s17, %s24
      %s101 = sor.u32 %s99, %s100
      %p102 = scmp.eq.s32.totalorder %s101, 0
      %s104 = sadd.s32 %s103, 1
      %s105 = scalar_select %p102, %s103, %s104
      %p108 = pneg %p102
      %p109 = scmp.eq.s32.totalorder %s9, 3
      %p110 = por %p108, %p109
      %p111 = scmp.ne.s32.totalorder %s103, %s106
      %p112 = scmp.eq.s32.totalorder %s9, 0
      %p113 = por %p111, %p112
      %p114 = scmp.ne.s32.totalorder %s103, %s106
      %p115 = scmp.eq.s32.totalorder %s14, 3
      %p116 = por %p114, %p115
      %p117 = scmp.ne.s32.totalorder %s106, %s107
      %p118 = scmp.eq.s32.totalorder %s14, 0
      %p119 = por %p117, %p118
      %p120 = scmp.ne.s32.totalorder %s106, %s107
      %p121 = scmp.eq.s32.totalorder %s15, 3
      %p122 = por %p120, %p121
      %p124 = scmp.ne.s32.totalorder %s107, %s123
      %p125 = scmp.eq.s32.totalorder %s15, 0
      %p126 = por %p124, %p125
      %p127 = scmp.le.s32.totalorder 1, %s9
      %p128 = scmp.lt.s32.totalorder %s9, 5
      %p129 = pnand %p127, %p128
      %p130 = pneg %p129
      // Predicated region
      $region9: #{_lambda_.1} parent=5 // pred_check
        _
      $region10: #{_lambda_.1} parent=5 // pred_check_branch
        %132 = sbr.rel (%p129) target = $region12
      $region11: #{_lambda_.1} parent=5 // pred_region
        %s133 = ssub.s32 %s9, 1
        // Predicated region
        $region13: #{_lambda_.1} parent=11 // pred_check
          %p134 = pneg %p70
        $region14: #{_lambda_.1} parent=11 // pred_check_branch
          %136 = sbr.rel (%p134) target = $region16
        $region15: #{_lambda_.1} parent=11 // pred_region
          _
        $region16: #{_lambda_.1} parent=11 // pred_fallthru
          _
        // Predicated region
        $region17: #{_lambda_.1} parent=11 // pred_check
          %p137 = pneg %p91
        $region18: #{_lambda_.1} parent=11 // pred_check_branch
          %139 = sbr.rel (%p137) target = $region20
        $region19: #{_lambda_.1} parent=11 // pred_region
          _
        $region20: #{_lambda_.1} parent=11 // pred_fallthru
          _
      $region12: #{_lambda_.1} parent=5 // pred_fallthru
        _
      %p140 = scmp.lt.s32.totalorder %s9, 4
      // Predicated region
      $region21: #{_lambda_.1} parent=5 // pred_check
        %p141 = pneg %p140
      $region22: #{_lambda_.1} parent=5 // pred_check_branch
        %143 = sbr.rel (%p141) target = $region24
      $region23: #{_lambda_.1} parent=5 // pred_region
        // Predicated region
        $region25: #{_lambda_.1} parent=23 // pred_check
          %p144 = pneg %p43
        $region26: #{_lambda_.1} parent=23 // pred_check_branch
          %146 = sbr.rel (%p144) target = $region28
        $region27: #{_lambda_.1} parent=23 // pred_region
          %s147 = sand.u32 %s33, 1
          %s148 = sand.u32 %s33, 1
          %s149 = smul.addr %s148, 768
          %s150 = scalar_lea.vmem [#allocation2], %s149
          %s151 = smul.u32 16, %s17
          %s152 = smul.addr %s16, 192
          %s153 = sadd.s32 %s151, %s152
          %s154 = smul.addr %s153, 8
          %s155 = scalar_lea.vmem %s0, %s154
          // Predicated region
          $region29: #{_lambda_.1} parent=27 // pred_check
            _
          $region30: #{_lambda_.1} parent=27 // pred_check_branch
            %157 = sbr.rel (0) target = $region32
          $region31: #{_lambda_.1} parent=27 // pred_region
            // Predicated region
            $region33: #{_lambda_.1} parent=31 // pred_check
              _
            $region34: #{_lambda_.1} parent=31 // pred_check_branch
              %159 = sbr.rel (0) target = $region36
            $region35: #{_lambda_.1} parent=31 // pred_region
              loop: start=0, step=1, limit=1
              $region37: #{_lambda_.1} parent=35 // loop_pre_header
                _
              $region38: #{_lambda_.1} parent=35 // loop_header
                %s161 = sphi 0, %s165
                %p162 = scmp.ge.s32.totalorder %s161, 1
                %s166 = sphi %s155, %s155
                %s167 = sphi %s150, %s150
              $region39: #{_lambda_.1} parent=35 // loop_header_branch
                %164 = sbr.rel (%p162) target = $region43
              $region40: #{_lambda_.1} parent=35 // loop_body
                %v168 = vld [vmem:[%s166] sm:$0xff]
                %169 = vst [vmem:[%s167] sm:$0xff] %v168
                %v170 = vld [vmem:[%s166 + $0x8] sm:$0xff]
                %171 = vst [vmem:[%s167 + $0x8] sm:$0xff] %v170
                %v172 = vld [vmem:[%s166 + $0x10] sm:$0xff]
                %173 = vst [vmem:[%s167 + $0x10] sm:$0xff] %v172
                %v174 = vld [vmem:[%s166 + $0x18] sm:$0xff]
                %175 = vst [vmem:[%s167 + $0x18] sm:$0xff] %v174
                %v176 = vld [vmem:[%s166 + $0x20] sm:$0xff]
                %177 = vst [vmem:[%s167 + $0x20] sm:$0xff] %v176
                %v178 = vld [vmem:[%s166 + $0x28] sm:$0xff]
                %179 = vst [vmem:[%s167 + $0x28] sm:$0xff] %v178
                %v180 = vld [vmem:[%s166 + $0x30] sm:$0xff]
                %181 = vst [vmem:[%s167 + $0x30] sm:$0xff] %v180
                %v182 = vld [vmem:[%s166 + $0x38] sm:$0xff]
                %183 = vst [vmem:[%s167 + $0x38] sm:$0xff] %v182
                %v184 = vld [vmem:[%s166 + $0x40] sm:$0xff]
                %185 = vst [vmem:[%s167 + $0x40] sm:$0xff] %v184
                %v186 = vld [vmem:[%s166 + $0x48] sm:$0xff]
                %187 = vst [vmem:[%s167 + $0x48] sm:$0xff] %v186
                %v188 = vld [vmem:[%s166 + $0x50] sm:$0xff]
                %189 = vst [vmem:[%s167 + $0x50] sm:$0xff] %v188
                %v190 = vld [vmem:[%s166 + $0x58] sm:$0xff]
                %191 = vst [vmem:[%s167 + $0x58] sm:$0xff] %v190
                %v192 = vld [vmem:[%s166 + $0x60] sm:$0xff]
                %193 = vst [vmem:[%s167 + $0x60] sm:$0xff] %v192
                %v194 = vld [vmem:[%s166 + $0x68] sm:$0xff]
                %195 = vst [vmem:[%s167 + $0x68] sm:$0xff] %v194
                %v196 = vld [vmem:[%s166 + $0x70] sm:$0xff]
                %197 = vst [vmem:[%s167 + $0x70] sm:$0xff] %v196
                %v198 = vld [vmem:[%s166 + $0x78] sm:$0xff]
                %199 = vst [vmem:[%s167 + $0x78] sm:$0xff] %v198
                %v200 = vld [vmem:[%s166 + $0x100] sm:$0xff]
                %201 = vst [vmem:[%s167 + $0x80] sm:$0xff] %v200
                %v202 = vld [vmem:[%s166 + $0x108] sm:$0xff]
                %203 = vst [vmem:[%s167 + $0x88] sm:$0xff] %v202
                %v204 = vld [vmem:[%s166 + $0x110] sm:$0xff]
                %205 = vst [vmem:[%s167 + $0x90] sm:$0xff] %v204
                %v206 = vld [vmem:[%s166 + $0x118] sm:$0xff]
                %207 = vst [vmem:[%s167 + $0x98] sm:$0xff] %v206
                %v208 = vld [vmem:[%s166 + $0x120] sm:$0xff]
                %209 = vst [vmem:[%s167 + $0xa0] sm:$0xff] %v208
                %v210 = vld [vmem:[%s166 + $0x128] sm:$0xff]
                %211 = vst [vmem:[%s167 + $0xa8] sm:$0xff] %v210
                %v212 = vld [vmem:[%s166 + $0x130] sm:$0xff]
                %213 = vst [vmem:[%s167 + $0xb0] sm:$0xff] %v212
                %v214 = vld [vmem:[%s166 + $0x138] sm:$0xff]
                %215 = vst [vmem:[%s167 + $0xb8] sm:$0xff] %v214
                %v216 = vld [vmem:[%s166 + $0x140] sm:$0xff]
                %217 = vst [vmem:[%s167 + $0xc0] sm:$0xff] %v216
                %v218 = vld [vmem:[%s166 + $0x148] sm:$0xff]
                %219 = vst [vmem:[%s167 + $0xc8] sm:$0xff] %v218
                %v220 = vld [vmem:[%s166 + $0x150] sm:$0xff]
                %221 = vst [vmem:[%s167 + $0xd0] sm:$0xff] %v220
                %v222 = vld [vmem:[%s166 + $0x158] sm:$0xff]
                %223 = vst [vmem:[%s167 + $0xd8] sm:$0xff] %v222
                %v224 = vld [vmem:[%s166 + $0x160] sm:$0xff]
                %225 = vst [vmem:[%s167 + $0xe0] sm:$0xff] %v224
                %v226 = vld [vmem:[%s166 + $0x168] sm:$0xff]
                %227 = vst [vmem:[%s167 + $0xe8] sm:$0xff] %v226
                %v228 = vld [vmem:[%s166 + $0x170] sm:$0xff]
                %229 = vst [vmem:[%s167 + $0xf0] sm:$0xff] %v228
                %v230 = vld [vmem:[%s166 + $0x178] sm:$0xff]
                %231 = vst [vmem:[%s167 + $0xf8] sm:$0xff] %v230
                %v232 = vld [vmem:[%s166 + $0x200] sm:$0xff]
                %233 = vst [vmem:[%s167 + $0x100] sm:$0xff] %v232
                %v234 = vld [vmem:[%s166 + $0x208] sm:$0xff]
                %235 = vst [vmem:[%s167 + $0x108] sm:$0xff] %v234
                %v236 = vld [vmem:[%s166 + $0x210] sm:$0xff]
                %237 = vst [vmem:[%s167 + $0x110] sm:$0xff] %v236
                %v238 = vld [vmem:[%s166 + $0x218] sm:$0xff]
                %239 = vst [vmem:[%s167 + $0x118] sm:$0xff] %v238
                %v240 = vld [vmem:[%s166 + $0x220] sm:$0xff]
                %241 = vst [vmem:[%s167 + $0x120] sm:$0xff] %v240
                %v242 = vld [vmem:[%s166 + $0x228] sm:$0xff]
                %243 = vst [vmem:[%s167 + $0x128] sm:$0xff] %v242
                %v244 = vld [vmem:[%s166 + $0x230] sm:$0xff]
                %245 = vst [vmem:[%s167 + $0x130] sm:$0xff] %v244
                %v246 = vld [vmem:[%s166 + $0x238] sm:$0xff]
                %247 = vst [vmem:[%s167 + $0x138] sm:$0xff] %v246
                %v248 = vld [vmem:[%s166 + $0x240] sm:$0xff]
                %249 = vst [vmem:[%s167 + $0x140] sm:$0xff] %v248
                %v250 = vld [vmem:[%s166 + $0x248] sm:$0xff]
                %251 = vst [vmem:[%s167 + $0x148] sm:$0xff] %v250
                %v252 = vld [vmem:[%s166 + $0x250] sm:$0xff]
                %253 = vst [vmem:[%s167 + $0x150] sm:$0xff] %v252
                %v254 = vld [vmem:[%s166 + $0x258] sm:$0xff]
                %255 = vst [vmem:[%s167 + $0x158] sm:$0xff] %v254
                %v256 = vld [vmem:[%s166 + $0x260] sm:$0xff]
                %257 = vst [vmem:[%s167 + $0x160] sm:$0xff] %v256
                %v258 = vld [vmem:[%s166 + $0x268] sm:$0xff]
                %259 = vst [vmem:[%s167 + $0x168] sm:$0xff] %v258
                %v260 = vld [vmem:[%s166 + $0x270] sm:$0xff]
                %261 = vst [vmem:[%s167 + $0x170] sm:$0xff] %v260
                %v262 = vld [vmem:[%s166 + $0x278] sm:$0xff]
                %263 = vst [vmem:[%s167 + $0x178] sm:$0xff] %v262
                %v264 = vld [vmem:[%s166 + $0x300] sm:$0xff]
                %265 = vst [vmem:[%s167 + $0x180] sm:$0xff] %v264
                %v266 = vld [vmem:[%s166 + $0x308] sm:$0xff]
                %267 = vst [vmem:[%s167 + $0x188] sm:$0xff] %v266
                %v268 = vld [vmem:[%s166 + $0x310] sm:$0xff]
                %269 = vst [vmem:[%s167 + $0x190] sm:$0xff] %v268
                %v270 = vld [vmem:[%s166 + $0x318] sm:$0xff]
                %271 = vst [vmem:[%s167 + $0x198] sm:$0xff] %v270
                %v272 = vld [vmem:[%s166 + $0x320] sm:$0xff]
                %273 = vst [vmem:[%s167 + $0x1a0] sm:$0xff] %v272
                %v274 = vld [vmem:[%s166 + $0x328] sm:$0xff]
                %275 = vst [vmem:[%s167 + $0x1a8] sm:$0xff] %v274
                %v276 = vld [vmem:[%s166 + $0x330] sm:$0xff]
                %277 = vst [vmem:[%s167 + $0x1b0] sm:$0xff] %v276
                %v278 = vld [vmem:[%s166 + $0x338] sm:$0xff]
                %279 = vst [vmem:[%s167 + $0x1b8] sm:$0xff] %v278
                %v280 = vld [vmem:[%s166 + $0x340] sm:$0xff]
                %281 = vst [vmem:[%s167 + $0x1c0] sm:$0xff] %v280
                %v282 = vld [vmem:[%s166 + $0x348] sm:$0xff]
                %283 = vst [vmem:[%s167 + $0x1c8] sm:$0xff] %v282
                %v284 = vld [vmem:[%s166 + $0x350] sm:$0xff]
                %285 = vst [vmem:[%s167 + $0x1d0] sm:$0xff] %v284
                %v286 = vld [vmem:[%s166 + $0x358] sm:$0xff]
                %287 = vst [vmem:[%s167 + $0x1d8] sm:$0xff] %v286
                %v288 = vld [vmem:[%s166 + $0x360] sm:$0xff]
                %289 = vst [vmem:[%s167 + $0x1e0] sm:$0xff] %v288
                %v290 = vld [vmem:[%s166 + $0x368] sm:$0xff]
                %291 = vst [vmem:[%s167 + $0x1e8] sm:$0xff] %v290
                %v292 = vld [vmem:[%s166 + $0x370] sm:$0xff]
                %293 = vst [vmem:[%s167 + $0x1f0] sm:$0xff] %v292
                %v294 = vld [vmem:[%s166 + $0x378] sm:$0xff]
                %295 = vst [vmem:[%s167 + $0x1f8] sm:$0xff] %v294
                %v296 = vld [vmem:[%s166 + $0x400] sm:$0xff]
                %297 = vst [vmem:[%s167 + $0x200] sm:$0xff] %v296
                %v298 = vld [vmem:[%s166 + $0x408] sm:$0xff]
                %299 = vst [vmem:[%s167 + $0x208] sm:$0xff] %v298
                %v300 = vld [vmem:[%s166 + $0x410] sm:$0xff]
                %301 = vst [vmem:[%s167 + $0x210] sm:$0xff] %v300
                %v302 = vld [vmem:[%s166 + $0x418] sm:$0xff]
                %303 = vst [vmem:[%s167 + $0x218] sm:$0xff] %v302
                %v304 = vld [vmem:[%s166 + $0x420] sm:$0xff]
                %305 = vst [vmem:[%s167 + $0x220] sm:$0xff] %v304
                %v306 = vld [vmem:[%s166 + $0x428] sm:$0xff]
                %307 = vst [vmem:[%s167 + $0x228] sm:$0xff] %v306
                %v308 = vld [vmem:[%s166 + $0x430] sm:$0xff]
                %309 = vst [vmem:[%s167 + $0x230] sm:$0xff] %v308
                %v310 = vld [vmem:[%s166 + $0x438] sm:$0xff]
                %311 = vst [vmem:[%s167 + $0x238] sm:$0xff] %v310
                %v312 = vld [vmem:[%s166 + $0x440] sm:$0xff]
                %313 = vst [vmem:[%s167 + $0x240] sm:$0xff] %v312
                %v314 = vld [vmem:[%s166 + $0x448] sm:$0xff]
                %315 = vst [vmem:[%s167 + $0x248] sm:$0xff] %v314
                %v316 = vld [vmem:[%s166 + $0x450] sm:$0xff]
                %317 = vst [vmem:[%s167 + $0x250] sm:$0xff] %v316
                %v318 = vld [vmem:[%s166 + $0x458] sm:$0xff]
                %319 = vst [vmem:[%s167 + $0x258] sm:$0xff] %v318
                %v320 = vld [vmem:[%s166 + $0x460] sm:$0xff]
                %321 = vst [vmem:[%s167 + $0x260] sm:$0xff] %v320
                %v322 = vld [vmem:[%s166 + $0x468] sm:$0xff]
                %323 = vst [vmem:[%s167 + $0x268] sm:$0xff] %v322
                %v324 = vld [vmem:[%s166 + $0x470] sm:$0xff]
                %325 = vst [vmem:[%s167 + $0x270] sm:$0xff] %v324
                %v326 = vld [vmem:[%s166 + $0x478] sm:$0xff]
                %327 = vst [vmem:[%s167 + $0x278] sm:$0xff] %v326
                %v328 = vld [vmem:[%s166 + $0x500] sm:$0xff]
                %329 = vst [vmem:[%s167 + $0x280] sm:$0xff] %v328
                %v330 = vld [vmem:[%s166 + $0x508] sm:$0xff]
                %331 = vst [vmem:[%s167 + $0x288] sm:$0xff] %v330
                %v332 = vld [vmem:[%s166 + $0x510] sm:$0xff]
                %333 = vst [vmem:[%s167 + $0x290] sm:$0xff] %v332
                %v334 = vld [vmem:[%s166 + $0x518] sm:$0xff]
                %335 = vst [vmem:[%s167 + $0x298] sm:$0xff] %v334
                %v336 = vld [vmem:[%s166 + $0x520] sm:$0xff]
                %337 = vst [vmem:[%s167 + $0x2a0] sm:$0xff] %v336
                %v338 = vld [vmem:[%s166 + $0x528] sm:$0xff]
                %339 = vst [vmem:[%s167 + $0x2a8] sm:$0xff] %v338
                %v340 = vld [vmem:[%s166 + $0x530] sm:$0xff]
                %341 = vst [vmem:[%s167 + $0x2b0] sm:$0xff] %v340
                %v342 = vld [vmem:[%s166 + $0x538] sm:$0xff]
                %343 = vst [vmem:[%s167 + $0x2b8] sm:$0xff] %v342
                %v344 = vld [vmem:[%s166 + $0x540] sm:$0xff]
                %345 = vst [vmem:[%s167 + $0x2c0] sm:$0xff] %v344
                %v346 = vld [vmem:[%s166 + $0x548] sm:$0xff]
                %347 = vst [vmem:[%s167 + $0x2c8] sm:$0xff] %v346
                %v348 = vld [vmem:[%s166 + $0x550] sm:$0xff]
                %349 = vst [vmem:[%s167 + $0x2d0] sm:$0xff] %v348
                %v350 = vld [vmem:[%s166 + $0x558] sm:$0xff]
                %351 = vst [vmem:[%s167 + $0x2d8] sm:$0xff] %v350
                %v352 = vld [vmem:[%s166 + $0x560] sm:$0xff]
                %353 = vst [vmem:[%s167 + $0x2e0] sm:$0xff] %v352
                %v354 = vld [vmem:[%s166 + $0x568] sm:$0xff]
                %355 = vst [vmem:[%s167 + $0x2e8] sm:$0xff] %v354
                %v356 = vld [vmem:[%s166 + $0x570] sm:$0xff]
                %357 = vst [vmem:[%s167 + $0x2f0] sm:$0xff] %v356
                %v358 = vld [vmem:[%s166 + $0x578] sm:$0xff]
                %359 = vst [vmem:[%s167 + $0x2f8] sm:$0xff] %v358
              $region41: #{_lambda_.1} parent=35 // loop_footer
                %s165 = sadd.s32 1, %s161
              $region42: #{_lambda_.1} parent=35 // loop_footer_branch
                %160 = sbr.rel target = $region38
              $region43: #{_lambda_.1} parent=35 // loop_exit
                _
            $region36: #{_lambda_.1} parent=31 // pred_fallthru
              _
            // Predicated region
            $region44: #{_lambda_.1} parent=31 // pred_check
              _
            $region45: #{_lambda_.1} parent=31 // pred_check_branch
              %361 = sbr.rel target = $region47
            $region46: #{_lambda_.1} parent=31 // pred_region
              _
            $region47: #{_lambda_.1} parent=31 // pred_fallthru
              _
          $region32: #{_lambda_.1} parent=27 // pred_fallthru
            _
          %362 = vnop
        $region28: #{_lambda_.1} parent=23 // pred_fallthru
          _
      $region24: #{_lambda_.1} parent=5 // pred_fallthru
        _
      %p363 = scmp.le.s32.totalorder 1, %s9
      %p364 = scmp.lt.s32.totalorder %s9, 5
      %p365 = pnand %p363, %p364
      %p366 = pneg %p365
      // Predicated region
      $region48: #{_lambda_.1} parent=5 // pred_check
        _
      $region49: #{_lambda_.1} parent=5 // pred_check_branch
        %368 = sbr.rel (%p365) target = $region51
      $region50: #{_lambda_.1} parent=5 // pred_region
        %s369 = ssub.s32 %s9, 1
        %s370 = sand.u32 %s36, 1
        %s371 = sand.u32 %s36, 1
        %s372 = smul.addr %s371, 768
        %s373 = scalar_lea.vmem [#allocation2], %s372
        // Predicated region
        $region52: #{_lambda_.1} parent=50 // pred_check
          %p374 = pneg %p49
        $region53: #{_lambda_.1} parent=50 // pred_check_branch
          %376 = sbr.rel (%p374) target = $region55
        $region54: #{_lambda_.1} parent=50 // pred_region
          _
        $region55: #{_lambda_.1} parent=50 // pred_fallthru
          _
        %s377 = sand.u32 %s36, 1
        %s378 = sand.u32 %s36, 1
        %s379 = smul.addr %s378, 768
        %s380 = scalar_lea.vmem [#allocation2], %s379
        %p381 = pneg %p49
        %p382 = pneg %p46
        %p383 = pneg %p70
        %p384 = pneg %p67
        %p385 = pneg %p91
        %p386 = pneg %p88
        %p387 = pneg %p119
        %p388 = pneg %p116
        %s389 = sand.u32 %s106, 1
        %s390 = sand.u32 %s106, 1
        %s391 = smul.addr %s390, 384
        %s392 = scalar_lea.vmem [#allocation3], %s391
        %s393 = smul.u32 16, %s19
        %s394 = smul.u32 16, %s19
        %v395 = vld [vmem:[%s1] sm:$0xff]
        %v396 = vld [vmem:[%s1 + $0x8] sm:$0xff]
        %v397 = vld [vmem:[%s1 + $0x10] sm:$0xff]
        %v398 = vld [vmem:[%s373] sm:$0xff]
        %v399 = vld [vmem:[%s373 + $0x8] sm:$0xff]
        %v400 = vld [vmem:[%s373 + $0x10] sm:$0xff]
        %v401 = vld [vmem:[%s373 + $0x18] sm:$0xff]
        %v402 = vld [vmem:[%s373 + $0x20] sm:$0xff]
        %v403 = vld [vmem:[%s373 + $0x28] sm:$0xff]
        %v404 = vld [vmem:[%s373 + $0x30] sm:$0xff]
        %v405 = vld [vmem:[%s373 + $0x38] sm:$0xff]
        %v406 = vld [vmem:[%s373 + $0x40] sm:$0xff]
        %v407 = vld [vmem:[%s373 + $0x48] sm:$0xff]
        %v408 = vld [vmem:[%s373 + $0x50] sm:$0xff]
        %v409 = vld [vmem:[%s373 + $0x58] sm:$0xff]
        %v410 = vld [vmem:[%s373 + $0x60] sm:$0xff]
        %v411 = vld [vmem:[%s373 + $0x68] sm:$0xff]
        %v412 = vld [vmem:[%s373 + $0x70] sm:$0xff]
        %v413 = vld [vmem:[%s373 + $0x78] sm:$0xff]
        %v414 = vld [vmem:[%s373 + $0x80] sm:$0xff]
        %v415 = vld [vmem:[%s373 + $0x88] sm:$0xff]
        %v416 = vld [vmem:[%s373 + $0x90] sm:$0xff]
        %v417 = vld [vmem:[%s373 + $0x98] sm:$0xff]
        %v418 = vld [vmem:[%s373 + $0xa0] sm:$0xff]
        %v419 = vld [vmem:[%s373 + $0xa8] sm:$0xff]
        %v420 = vld [vmem:[%s373 + $0xb0] sm:$0xff]
        %v421 = vld [vmem:[%s373 + $0xb8] sm:$0xff]
        %v422 = vld [vmem:[%s373 + $0xc0] sm:$0xff]
        %v423 = vld [vmem:[%s373 + $0xc8] sm:$0xff]
        %v424 = vld [vmem:[%s373 + $0xd0] sm:$0xff]
        %v425 = vld [vmem:[%s373 + $0xd8] sm:$0xff]
        %v426 = vld [vmem:[%s373 + $0xe0] sm:$0xff]
        %v427 = vld [vmem:[%s373 + $0xe8] sm:$0xff]
        %v428 = vld [vmem:[%s373 + $0xf0] sm:$0xff]
        %v429 = vld [vmem:[%s373 + $0xf8] sm:$0xff]
        %v430 = vld [vmem:[%s373 + $0x100] sm:$0xff]
        %v431 = vld [vmem:[%s373 + $0x108] sm:$0xff]
        %v432 = vld [vmem:[%s373 + $0x110] sm:$0xff]
        %v433 = vld [vmem:[%s373 + $0x118] sm:$0xff]
        %v434 = vld [vmem:[%s373 + $0x120] sm:$0xff]
        %v435 = vld [vmem:[%s373 + $0x128] sm:$0xff]
        %v436 = vld [vmem:[%s373 + $0x130] sm:$0xff]
        %v437 = vld [vmem:[%s373 + $0x138] sm:$0xff]
        %v438 = vld [vmem:[%s373 + $0x140] sm:$0xff]
        %v439 = vld [vmem:[%s373 + $0x148] sm:$0xff]
        %v440 = vld [vmem:[%s373 + $0x150] sm:$0xff]
        %v441 = vld [vmem:[%s373 + $0x158] sm:$0xff]
        %v442 = vld [vmem:[%s373 + $0x160] sm:$0xff]
        %v443 = vld [vmem:[%s373 + $0x168] sm:$0xff]
        %v444 = vld [vmem:[%s373 + $0x170] sm:$0xff]
        %v445 = vld [vmem:[%s373 + $0x178] sm:$0xff]
        %v446 = vld [vmem:[%s373 + $0x180] sm:$0xff]
        %v447 = vld [vmem:[%s373 + $0x188] sm:$0xff]
        %v448 = vld [vmem:[%s373 + $0x190] sm:$0xff]
        %v449 = vld [vmem:[%s373 + $0x198] sm:$0xff]
        %v450 = vld [vmem:[%s373 + $0x1a0] sm:$0xff]
        %v451 = vld [vmem:[%s373 + $0x1a8] sm:$0xff]
        %v452 = vld [vmem:[%s373 + $0x1b0] sm:$0xff]
        %v453 = vld [vmem:[%s373 + $0x1b8] sm:$0xff]
        %v454 = vld [vmem:[%s373 + $0x1c0] sm:$0xff]
        %v455 = vld [vmem:[%s373 + $0x1c8] sm:$0xff]
        %v456 = vld [vmem:[%s373 + $0x1d0] sm:$0xff]
        %v457 = vld [vmem:[%s373 + $0x1d8] sm:$0xff]
        %v458 = vld [vmem:[%s373 + $0x1e0] sm:$0xff]
        %v459 = vld [vmem:[%s373 + $0x1e8] sm:$0xff]
        %v460 = vld [vmem:[%s373 + $0x1f0] sm:$0xff]
        %v461 = vld [vmem:[%s373 + $0x1f8] sm:$0xff]
        %v462 = vld [vmem:[%s373 + $0x200] sm:$0xff]
        %v463 = vld [vmem:[%s373 + $0x208] sm:$0xff]
        %v464 = vld [vmem:[%s373 + $0x210] sm:$0xff]
        %v465 = vld [vmem:[%s373 + $0x218] sm:$0xff]
        %v466 = vld [vmem:[%s373 + $0x220] sm:$0xff]
        %v467 = vld [vmem:[%s373 + $0x228] sm:$0xff]
        %v468 = vld [vmem:[%s373 + $0x230] sm:$0xff]
        %v469 = vld [vmem:[%s373 + $0x238] sm:$0xff]
        %v470 = vld [vmem:[%s373 + $0x240] sm:$0xff]
        %v471 = vld [vmem:[%s373 + $0x248] sm:$0xff]
        %v472 = vld [vmem:[%s373 + $0x250] sm:$0xff]
        %v473 = vld [vmem:[%s373 + $0x258] sm:$0xff]
        %v474 = vld [vmem:[%s373 + $0x260] sm:$0xff]
        %v475 = vld [vmem:[%s373 + $0x268] sm:$0xff]
        %v476 = vld [vmem:[%s373 + $0x270] sm:$0xff]
        %v477 = vld [vmem:[%s373 + $0x278] sm:$0xff]
        %v478 = vld [vmem:[%s373 + $0x280] sm:$0xff]
        %v479 = vld [vmem:[%s373 + $0x288] sm:$0xff]
        %v480 = vld [vmem:[%s373 + $0x290] sm:$0xff]
        %v481 = vld [vmem:[%s373 + $0x298] sm:$0xff]
        %v482 = vld [vmem:[%s373 + $0x2a0] sm:$0xff]
        %v483 = vld [vmem:[%s373 + $0x2a8] sm:$0xff]
        %v484 = vld [vmem:[%s373 + $0x2b0] sm:$0xff]
        %v485 = vld [vmem:[%s373 + $0x2b8] sm:$0xff]
        %v486 = vld [vmem:[%s373 + $0x2c0] sm:$0xff]
        %v487 = vld [vmem:[%s373 + $0x2c8] sm:$0xff]
        %v488 = vld [vmem:[%s373 + $0x2d0] sm:$0xff]
        %v489 = vld [vmem:[%s373 + $0x2d8] sm:$0xff]
        %v490 = vld [vmem:[%s373 + $0x2e0] sm:$0xff]
        %v491 = vld [vmem:[%s373 + $0x2e8] sm:$0xff]
        %v492 = vld [vmem:[%s373 + $0x2f0] sm:$0xff]
        %v493 = vld [vmem:[%s373 + $0x2f8] sm:$0xff]
        %v494 = vld [vmem:[%s2] sm:$0xff]
        %v495 = vld [vmem:[%s2 + $0x8] sm:$0xff]
        %v496 = vld [vmem:[%s2 + $0x10] sm:$0xff]
        %498 = vset.pattern.permute.xlu0 0
        %499 = vperm.xlu0 %498, %v494
        %v500 = vpop.permute.xlu0 %499
        %503 = vset.pattern.permute.xlu0 0
        %504 = vperm.xlu0 %503, %v495
        %v505 = vpop.permute.xlu0 %504
        %508 = vset.pattern.permute.xlu0 0
        %509 = vperm.xlu0 %508, %v496
        %v510 = vpop.permute.xlu0 %509
        %vm512 = vcmask 392192
        %v514 = vsel %vm512, %v395, 0
        %v517 = vsel %vm512, %v396, 0
        %v520 = vsel %vm512, %v397, 0
        %522 = vmatprep.subr.mxu0 %v399
        %523 = vmatpush1.msra.mxu0 %v398
        %524 = vmatprep.subr.mxu0 %v415
        %525 = vmatpush1.msra.mxu0 %v414
        %526 = vmatprep.subr.mxu0 %v431
        %527 = vmatpush1.msra.mxu0 %v430
        %528 = vmatprep.subr.mxu0 %v447
        %529 = vmatpush1.msra.mxu0 %v446
        %530 = vmatprep.subr.mxu0 %v463
        %531 = vmatpush1.msra.mxu0 %v462
        %532 = vmatprep.subr.mxu0 %v479
        %533 = vmatpush1.msra.mxu0 %v478
        %534 = vmatprep.subr.mxu0 0.0
        %535 = vmatpush1.msra.mxu0 0.0
        %536 = vmatprep.subr.mxu0 0.0
        %537 = vmatpush1.msra.mxu0 0.0
        %538 = vmatprep.subr.mxu0 0.0
        %539 = vmatpush1.msra.mxu0 0.0
        %540 = vmatprep.subr.mxu0 0.0
        %541 = vmatpush1.msra.mxu0 0.0
        %542 = vmatprep.subr.mxu0 0.0
        %543 = vmatpush1.msra.mxu0 0.0
        %544 = vmatprep.subr.mxu0 0.0
        %545 = vmatpush1.msra.mxu0 0.0
        %546 = vmatprep.subr.mxu0 0.0
        %547 = vmatpush1.msra.mxu0 0.0
        %548 = vmatprep.subr.mxu0 0.0
        %549 = vmatpush1.msra.mxu0 0.0
        %550 = vmatprep.subr.mxu0 0.0
        %551 = vmatpush1.msra.mxu0 0.0
        %552 = vmatprep.subr.mxu0 0.0
        %553 = vmatpush1.msra.mxu0 0.0
        %554 = vmatprep.subr.mxu0 0.0
        %555 = vmatpush1.msra.mxu0 0.0
        %556 = vmatprep.subr.mxu0 0.0
        %557 = vmatpush1.msra.mxu0 0.0
        %558 = vmatprep.subr.mxu0 0.0
        %559 = vmatpush1.msra.mxu0 0.0
        %560 = vmatprep.subr.mxu0 0.0
        %561 = vmatpush1.msra.mxu0 0.0
        %562 = vmatprep.subr.mxu0 0.0
        %563 = vmatpush1.msra.mxu0 0.0
        %564 = vmatprep.subr.mxu0 0.0
        %565 = vmatpush1.msra.mxu0 0.0
        %566 = vmatprep.subr.mxu0 0.0
        %567 = vmatpush1.msra.mxu0 0.0
        %568 = vmatprep.subr.mxu0 0.0
        %569 = vmatpush1.msra.mxu0 0.0
        %570 = vmatprep.subr.mxu0 0.0
        %571 = vmatpush1.msra.mxu0 0.0
        %572 = vmatprep.subr.mxu0 0.0
        %573 = vmatpush1.msra.mxu0 0.0
        %574 = vmatprep.subr.mxu0 0.0
        %575 = vmatpush1.msra.mxu0 0.0
        %576 = vmatprep.subr.mxu0 0.0
        %577 = vmatpush1.msra.mxu0 0.0
        %578 = vmatprep.subr.mxu0 0.0
        %579 = vmatpush1.msra.mxu0 0.0
        %580 = vmatprep.subr.mxu0 0.0
        %581 = vmatpush1.msra.mxu0 0.0
        %582 = vmatprep.subr.mxu0 0.0
        %583 = vmatpush1.msra.mxu0 0.0
        %584 = vmatprep.subr.mxu0 0.0
        %585 = vmatpush1.msra.mxu0 0.0
        %586 = vmatprep.mubr.f32.mxu0 0.0
        %587 = vmatmul.mubr.f32.gmra.mrb[0].mxu0 %v514
        %v588 = vpop.f32.mrb[0].mxu0
        %v589 = vadd.f32 %v500, %v588
        %v590 = vpop.f32.mrb[0].mxu0
        %v591 = vadd.f32 %v500, %v590
        %592 = vmatprep.mubr.f32.mxu0 0.0
        %593 = vmatmul.mubr.f32.gmra.mrb[0].mxu0 %v517
        %v594 = vpop.f32.mrb[0].mxu0
        %v595 = vadd.f32 %v505, %v594
        %v596 = vpop.f32.mrb[0].mxu0
        %v597 = vadd.f32 %v505, %v596
        %598 = vmatprep.mubr.f32.mxu0 0.0
        %599 = vmatmul.mubr.f32.gmra.mrb[0].mxu0 %v520
        %v600 = vpop.f32.mrb[0].mxu0
        %v601 = vadd.f32 %v510, %v600
        %v602 = vpop.f32.mrb[0].mxu0
        %v603 = vadd.f32 %v510, %v602
        %604 = vdwg.mxu0
        %605 = vmatprep.subr.mxu0 %v401
        %606 = vmatpush1.msra.mxu0 %v400
        %607 = vmatprep.subr.mxu0 %v417
        %608 = vmatpush1.msra.mxu0 %v416
        %609 = vmatprep.subr.mxu0 %v433
        %610 = vmatpush1.msra.mxu0 %v432
        %611 = vmatprep.subr.mxu0 %v449
        %612 = vmatpush1.msra.mxu0 %v448
        %613 = vmatprep.subr.mxu0 %v465
        %614 = vmatpush1.msra.mxu0 %v464
        %615 = vmatprep.subr.mxu0 %v481
        %616 = vmatpush1.msra.mxu0 %v480
        %617 = vmatprep.subr.mxu0 0.0
        %618 = vmatpush1.msra.mxu0 0.0
        %619 = vmatprep.subr.mxu0 0.0
        %620 = vmatpush1.msra.mxu0 0.0
        %621 = vmatprep.subr.mxu0 0.0
        %622 = vmatpush1.msra.mxu0 0.0
        %623 = vmatprep.subr.mxu0 0.0
        %624 = vmatpush1.msra.mxu0 0.0
        %625 = vmatprep.subr.mxu0 0.0
        %626 = vmatpush1.msra.mxu0 0.0
        %627 = vmatprep.subr.mxu0 0.0
        %628 = vmatpush1.msra.mxu0 0.0
        %629 = vmatprep.subr.mxu0 0.0
        %630 = vmatpush1.msra.mxu0 0.0
        %631 = vmatprep.subr.mxu0 0.0
        %632 = vmatpush1.msra.mxu0 0.0
        %633 = vmatprep.subr.mxu0 0.0
        %634 = vmatpush1.msra.mxu0 0.0
        %635 = vmatprep.subr.mxu0 0.0
        %636 = vmatpush1.msra.mxu0 0.0
        %637 = vmatprep.subr.mxu0 0.0
        %638 = vmatpush1.msra.mxu0 0.0
        %639 = vmatprep.subr.mxu0 0.0
        %640 = vmatpush1.msra.mxu0 0.0
        %641 = vmatprep.subr.mxu0 0.0
        %642 = vmatpush1.msra.mxu0 0.0
        %643 = vmatprep.subr.mxu0 0.0
        %644 = vmatpush1.msra.mxu0 0.0
        %645 = vmatprep.subr.mxu0 0.0
        %646 = vmatpush1.msra.mxu0 0.0
        %647 = vmatprep.subr.mxu0 0.0
        %648 = vmatpush1.msra.mxu0 0.0
        %649 = vmatprep.subr.mxu0 0.0
        %650 = vmatpush1.msra.mxu0 0.0
        %651 = vmatprep.subr.mxu0 0.0
        %652 = vmatpush1.msra.mxu0 0.0
        %653 = vmatprep.subr.mxu0 0.0
        %654 = vmatpush1.msra.mxu0 0.0
        %655 = vmatprep.subr.mxu0 0.0
        %656 = vmatpush1.msra.mxu0 0.0
        %657 = vmatprep.subr.mxu0 0.0
        %658 = vmatpush1.msra.mxu0 0.0
        %659 = vmatprep.subr.mxu0 0.0
        %660 = vmatpush1.msra.mxu0 0.0
        %661 = vmatprep.subr.mxu0 0.0
        %662 = vmatpush1.msra.mxu0 0.0
        %663 = vmatprep.subr.mxu0 0.0
        %664 = vmatpush1.msra.mxu0 0.0
        %665 = vmatprep.subr.mxu0 0.0
        %666 = vmatpush1.msra.mxu0 0.0
        %667 = vmatprep.subr.mxu0 0.0
        %668 = vmatpush1.msra.mxu0 0.0
        %669 = vmatprep.mubr.f32.mxu0 0.0
        %670 = vmatmul.mubr.f32.gmra.mrb[0].mxu0 %v514
        %v671 = vpop.f32.mrb[0].mxu0
        %v672 = vadd.f32 %v500, %v671
        %v673 = vpop.f32.mrb[0].mxu0
        %v674 = vadd.f32 %v500, %v673
        %675 = vmatprep.mubr.f32.mxu0 0.0
        %676 = vmatmul.mubr.f32.gmra.mrb[0].mxu0 %v517
        %v677 = vpop.f32.mrb[0].mxu0
        %v678 = vadd.f32 %v505, %v677
        %v679 = vpop.f32.mrb[0].mxu0
        %v680 = vadd.f32 %v505, %v679
        %681 = vmatprep.mubr.f32.mxu0 0.0
        %682 = vmatmul.mubr.f32.gmra.mrb[0].mxu0 %v520
        %v683 = vpop.f32.mrb[0].mxu0
        %v684 = vadd.f32 %v510, %v683
        %v685 = vpop.f32.mrb[0].mxu0
        %v686 = vadd.f32 %v510, %v685
        %687 = vdwg.mxu0
        %688 = vmatprep.subr.mxu0 %v403
        %689 = vmatpush1.msra.mxu0 %v402
        %690 = vmatprep.subr.mxu0 %v419
        %691 = vmatpush1.msra.mxu0 %v418
        %692 = vmatprep.subr.mxu0 %v435
        %693 = vmatpush1.msra.mxu0 %v434
        %694 = vmatprep.subr.mxu0 %v451
        %695 = vmatpush1.msra.mxu0 %v450
        %696 = vmatprep.subr.mxu0 %v467
        %697 = vmatpush1.msra.mxu0 %v466
        %698 = vmatprep.subr.mxu0 %v483
        %699 = vmatpush1.msra.mxu0 %v482
        %700 = vmatprep.subr.mxu0 0.0
        %701 = vmatpush1.msra.mxu0 0.0
        %702 = vmatprep.subr.mxu0 0.0
        %703 = vmatpush1.msra.mxu0 0.0
        %704 = vmatprep.subr.mxu0 0.0
        %705 = vmatpush1.msra.mxu0 0.0
        %706 = vmatprep.subr.mxu0 0.0
        %707 = vmatpush1.msra.mxu0 0.0
        %708 = vmatprep.subr.mxu0 0.0
        %709 = vmatpush1.msra.mxu0 0.0
        %710 = vmatprep.subr.mxu0 0.0
        %711 = vmatpush1.msra.mxu0 0.0
        %712 = vmatprep.subr.mxu0 0.0
        %713 = vmatpush1.msra.mxu0 0.0
        %714 = vmatprep.subr.mxu0 0.0
        %715 = vmatpush1.msra.mxu0 0.0
        %716 = vmatprep.subr.mxu0 0.0
        %717 = vmatpush1.msra.mxu0 0.0
        %718 = vmatprep.subr.mxu0 0.0
        %719 = vmatpush1.msra.mxu0 0.0
        %720 = vmatprep.subr.mxu0 0.0
        %721 = vmatpush1.msra.mxu0 0.0
        %722 = vmatprep.subr.mxu0 0.0
        %723 = vmatpush1.msra.mxu0 0.0
        %724 = vmatprep.subr.mxu0 0.0
        %725 = vmatpush1.msra.mxu0 0.0
        %726 = vmatprep.subr.mxu0 0.0
        %727 = vmatpush1.msra.mxu0 0.0
        %728 = vmatprep.subr.mxu0 0.0
        %729 = vmatpush1.msra.mxu0 0.0
        %730 = vmatprep.subr.mxu0 0.0
        %731 = vmatpush1.msra.mxu0 0.0
        %732 = vmatprep.subr.mxu0 0.0
        %733 = vmatpush1.msra.mxu0 0.0
        %734 = vmatprep.subr.mxu0 0.0
        %735 = vmatpush1.msra.mxu0 0.0
        %736 = vmatprep.subr.mxu0 0.0
        %737 = vmatpush1.msra.mxu0 0.0
        %738 = vmatprep.subr.mxu0 0.0
        %739 = vmatpush1.msra.mxu0 0.0
        %740 = vmatprep.subr.mxu0 0.0
        %741 = vmatpush1.msra.mxu0 0.0
        %742 = vmatprep.subr.mxu0 0.0
        %743 = vmatpush1.msra.mxu0 0.0
        %744 = vmatprep.subr.mxu0 0.0
        %745 = vmatpush1.msra.mxu0 0.0
        %746 = vmatprep.subr.mxu0 0.0
        %747 = vmatpush1.msra.mxu0 0.0
        %748 = vmatprep.subr.mxu0 0.0
        %749 = vmatpush1.msra.mxu0 0.0
        %750 = vmatprep.subr.mxu0 0.0
        %751 = vmatpush1.msra.mxu0 0.0
        %752 = vmatprep.mubr.f32.mxu0 0.0
        %753 = vmatmul.mubr.f32.gmra.mrb[0].mxu0 %v514
        %v754 = vpop.f32.mrb[0].mxu0
        %v755 = vadd.f32 %v500, %v754
        %v756 = vpop.f32.mrb[0].mxu0
        %v757 = vadd.f32 %v500, %v756
        %758 = vmatprep.mubr.f32.mxu0 0.0
        %759 = vmatmul.mubr.f32.gmra.mrb[0].mxu0 %v517
        %v760 = vpop.f32.mrb[0].mxu0
        %v761 = vadd.f32 %v505, %v760
        %v762 = vpop.f32.mrb[0].mxu0
        %v763 = vadd.f32 %v505, %v762
        %764 = vmatprep.mubr.f32.mxu0 0.0
        %765 = vmatmul.mubr.f32.gmra.mrb[0].mxu0 %v520
        %v766 = vpop.f32.mrb[0].mxu0
        %v767 = vadd.f32 %v510, %v766
        %v768 = vpop.f32.mrb[0].mxu0
        %v769 = vadd.f32 %v510, %v768
        %770 = vdwg.mxu0
        %771 = vmatprep.subr.mxu0 %v405
        %772 = vmatpush1.msra.mxu0 %v404
        %773 = vmatprep.subr.mxu0 %v421
        %774 = vmatpush1.msra.mxu0 %v420
        %775 = vmatprep.subr.mxu0 %v437
        %776 = vmatpush1.msra.mxu0 %v436
        %777 = vmatprep.subr.mxu0 %v453
        %778 = vmatpush1.msra.mxu0 %v452
        %779 = vmatprep.subr.mxu0 %v469
        %780 = vmatpush1.msra.mxu0 %v468
        %781 = vmatprep.subr.mxu0 %v485
        %782 = vmatpush1.msra.mxu0 %v484
        %783 = vmatprep.subr.mxu0 0.0
        %784 = vmatpush1.msra.mxu0 0.0
        %785 = vmatprep.subr.mxu0 0.0
        %786 = vmatpush1.msra.mxu0 0.0
        %787 = vmatprep.subr.mxu0 0.0
        %788 = vmatpush1.msra.mxu0 0.0
        %789 = vmatprep.subr.mxu0 0.0
        %790 = vmatpush1.msra.mxu0 0.0
        %791 = vmatprep.subr.mxu0 0.0
        %792 = vmatpush1.msra.mxu0 0.0
        %793 = vmatprep.subr.mxu0 0.0
        %794 = vmatpush1.msra.mxu0 0.0
        %795 = vmatprep.subr.mxu0 0.0
        %796 = vmatpush1.msra.mxu0 0.0
        %797 = vmatprep.subr.mxu0 0.0
        %798 = vmatpush1.msra.mxu0 0.0
        %799 = vmatprep.subr.mxu0 0.0
        %800 = vmatpush1.msra.mxu0 0.0
        %801 = vmatprep.subr.mxu0 0.0
        %802 = vmatpush1.msra.mxu0 0.0
        %803 = vmatprep.subr.mxu0 0.0
        %804 = vmatpush1.msra.mxu0 0.0
        %805 = vmatprep.subr.mxu0 0.0
        %806 = vmatpush1.msra.mxu0 0.0
        %807 = vmatprep.subr.mxu0 0.0
        %808 = vmatpush1.msra.mxu0 0.0
        %809 = vmatprep.subr.mxu0 0.0
        %810 = vmatpush1.msra.mxu0 0.0
        %811 = vmatprep.subr.mxu0 0.0
        %812 = vmatpush1.msra.mxu0 0.0
        %813 = vmatprep.subr.mxu0 0.0
        %814 = vmatpush1.msra.mxu0 0.0
        %815 = vmatprep.subr.mxu0 0.0
        %816 = vmatpush1.msra.mxu0 0.0
        %817 = vmatprep.subr.mxu0 0.0
        %818 = vmatpush1.msra.mxu0 0.0
        %819 = vmatprep.subr.mxu0 0.0
        %820 = vmatpush1.msra.mxu0 0.0
        %821 = vmatprep.subr.mxu0 0.0
        %822 = vmatpush1.msra.mxu0 0.0
        %823 = vmatprep.subr.mxu0 0.0
        %824 = vmatpush1.msra.mxu0 0.0
        %825 = vmatprep.subr.mxu0 0.0
        %826 = vmatpush1.msra.mxu0 0.0
        %827 = vmatprep.subr.mxu0 0.0
        %828 = vmatpush1.msra.mxu0 0.0
        %829 = vmatprep.subr.mxu0 0.0
        %830 = vmatpush1.msra.mxu0 0.0
        %831 = vmatprep.subr.mxu0 0.0
        %832 = vmatpush1.msra.mxu0 0.0
        %833 = vmatprep.subr.mxu0 0.0
        %834 = vmatpush1.msra.mxu0 0.0
        %835 = vmatprep.mubr.f32.mxu0 0.0
        %836 = vmatmul.mubr.f32.gmra.mrb[0].mxu0 %v514
        %v837 = vpop.f32.mrb[0].mxu0
        %v838 = vadd.f32 %v500, %v837
        %v839 = vpop.f32.mrb[0].mxu0
        %v840 = vadd.f32 %v500, %v839
        %841 = vmatprep.mubr.f32.mxu0 0.0
        %842 = vmatmul.mubr.f32.gmra.mrb[0].mxu0 %v517
        %v843 = vpop.f32.mrb[0].mxu0
        %v844 = vadd.f32 %v505, %v843
        %v845 = vpop.f32.mrb[0].mxu0
        %v846 = vadd.f32 %v505, %v845
        %847 = vmatprep.mubr.f32.mxu0 0.0
        %848 = vmatmul.mubr.f32.gmra.mrb[0].mxu0 %v520
        %v849 = vpop.f32.mrb[0].mxu0
        %v850 = vadd.f32 %v510, %v849
        %v851 = vpop.f32.mrb[0].mxu0
        %v852 = vadd.f32 %v510, %v851
        %853 = vdwg.mxu0
        %854 = vmatprep.subr.mxu0 %v407
        %855 = vmatpush1.msra.mxu0 %v406
        %856 = vmatprep.subr.mxu0 %v423
        %857 = vmatpush1.msra.mxu0 %v422
        %858 = vmatprep.subr.mxu0 %v439
        %859 = vmatpush1.msra.mxu0 %v438
        %860 = vmatprep.subr.mxu0 %v455
        %861 = vmatpush1.msra.mxu0 %v454
        %862 = vmatprep.subr.mxu0 %v471
        %863 = vmatpush1.msra.mxu0 %v470
        %864 = vmatprep.subr.mxu0 %v487
        %865 = vmatpush1.msra.mxu0 %v486
        %866 = vmatprep.subr.mxu0 0.0
        %867 = vmatpush1.msra.mxu0 0.0
        %868 = vmatprep.subr.mxu0 0.0
        %869 = vmatpush1.msra.mxu0 0.0
        %870 = vmatprep.subr.mxu0 0.0
        %871 = vmatpush1.msra.mxu0 0.0
        %872 = vmatprep.subr.mxu0 0.0
        %873 = vmatpush1.msra.mxu0 0.0
        %874 = vmatprep.subr.mxu0 0.0
        %875 = vmatpush1.msra.mxu0 0.0
        %876 = vmatprep.subr.mxu0 0.0
        %877 = vmatpush1.msra.mxu0 0.0
        %878 = vmatprep.subr.mxu0 0.0
        %879 = vmatpush1.msra.mxu0 0.0
        %880 = vmatprep.subr.mxu0 0.0
        %881 = vmatpush1.msra.mxu0 0.0
        %882 = vmatprep.subr.mxu0 0.0
        %883 = vmatpush1.msra.mxu0 0.0
        %884 = vmatprep.subr.mxu0 0.0
        %885 = vmatpush1.msra.mxu0 0.0
        %886 = vmatprep.subr.mxu0 0.0
        %887 = vmatpush1.msra.mxu0 0.0
        %888 = vmatprep.subr.mxu0 0.0
        %889 = vmatpush1.msra.mxu0 0.0
        %890 = vmatprep.subr.mxu0 0.0
        %891 = vmatpush1.msra.mxu0 0.0
        %892 = vmatprep.subr.mxu0 0.0
        %893 = vmatpush1.msra.mxu0 0.0
        %894 = vmatprep.subr.mxu0 0.0
        %895 = vmatpush1.msra.mxu0 0.0
        %896 = vmatprep.subr.mxu0 0.0
        %897 = vmatpush1.msra.mxu0 0.0
        %898 = vmatprep.subr.mxu0 0.0
        %899 = vmatpush1.msra.mxu0 0.0
        %900 = vmatprep.subr.mxu0 0.0
        %901 = vmatpush1.msra.mxu0 0.0
        %902 = vmatprep.subr.mxu0 0.0
        %903 = vmatpush1.msra.mxu0 0.0
        %904 = vmatprep.subr.mxu0 0.0
        %905 = vmatpush1.msra.mxu0 0.0
        %906 = vmatprep.subr.mxu0 0.0
        %907 = vmatpush1.msra.mxu0 0.0
        %908 = vmatprep.subr.mxu0 0.0
        %909 = vmatpush1.msra.mxu0 0.0
        %910 = vmatprep.subr.mxu0 0.0
        %911 = vmatpush1.msra.mxu0 0.0
        %912 = vmatprep.subr.mxu0 0.0
        %913 = vmatpush1.msra.mxu0 0.0
        %914 = vmatprep.subr.mxu0 0.0
        %915 = vmatpush1.msra.mxu0 0.0
        %916 = vmatprep.subr.mxu0 0.0
        %917 = vmatpush1.msra.mxu0 0.0
        %918 = vmatprep.mubr.f32.mxu0 0.0
        %919 = vmatmul.mubr.f32.gmra.mrb[0].mxu0 %v514
        %v920 = vpop.f32.mrb[0].mxu0
        %v921 = vadd.f32 %v500, %v920
        %v922 = vpop.f32.mrb[0].mxu0
        %v923 = vadd.f32 %v500, %v922
        %924 = vmatprep.mubr.f32.mxu0 0.0
        %925 = vmatmul.mubr.f32.gmra.mrb[0].mxu0 %v517
        %v926 = vpop.f32.mrb[0].mxu0
        %v927 = vadd.f32 %v505, %v926
        %v928 = vpop.f32.mrb[0].mxu0
        %v929 = vadd.f32 %v505, %v928
        %930 = vmatprep.mubr.f32.mxu0 0.0
        %931 = vmatmul.mubr.f32.gmra.mrb[0].mxu0 %v520
        %v932 = vpop.f32.mrb[0].mxu0
        %v933 = vadd.f32 %v510, %v932
        %v934 = vpop.f32.mrb[0].mxu0
        %v935 = vadd.f32 %v510, %v934
        %936 = vdwg.mxu0
        %937 = vmatprep.subr.mxu0 %v409
        %938 = vmatpush1.msra.mxu0 %v408
        %939 = vmatprep.subr.mxu0 %v425
        %940 = vmatpush1.msra.mxu0 %v424
        %941 = vmatprep.subr.mxu0 %v441
        %942 = vmatpush1.msra.mxu0 %v440
        %943 = vmatprep.subr.mxu0 %v457
        %944 = vmatpush1.msra.mxu0 %v456
        %945 = vmatprep.subr.mxu0 %v473
        %946 = vmatpush1.msra.mxu0 %v472
        %947 = vmatprep.subr.mxu0 %v489
        %948 = vmatpush1.msra.mxu0 %v488
        %949 = vmatprep.subr.mxu0 0.0
        %950 = vmatpush1.msra.mxu0 0.0
        %951 = vmatprep.subr.mxu0 0.0
        %952 = vmatpush1.msra.mxu0 0.0
        %953 = vmatprep.subr.mxu0 0.0
        %954 = vmatpush1.msra.mxu0 0.0
        %955 = vmatprep.subr.mxu0 0.0
        %956 = vmatpush1.msra.mxu0 0.0
        %957 = vmatprep.subr.mxu0 0.0
        %958 = vmatpush1.msra.mxu0 0.0
        %959 = vmatprep.subr.mxu0 0.0
        %960 = vmatpush1.msra.mxu0 0.0
        %961 = vmatprep.subr.mxu0 0.0
        %962 = vmatpush1.msra.mxu0 0.0
        %963 = vmatprep.subr.mxu0 0.0
        %964 = vmatpush1.msra.mxu0 0.0
        %965 = vmatprep.subr.mxu0 0.0
        %966 = vmatpush1.msra.mxu0 0.0
        %967 = vmatprep.subr.mxu0 0.0
        %968 = vmatpush1.msra.mxu0 0.0
        %969 = vmatprep.subr.mxu0 0.0
        %970 = vmatpush1.msra.mxu0 0.0
        %971 = vmatprep.subr.mxu0 0.0
        %972 = vmatpush1.msra.mxu0 0.0
        %973 = vmatprep.subr.mxu0 0.0
        %974 = vmatpush1.msra.mxu0 0.0
        %975 = vmatprep.subr.mxu0 0.0
        %976 = vmatpush1.msra.mxu0 0.0
        %977 = vmatprep.subr.mxu0 0.0
        %978 = vmatpush1.msra.mxu0 0.0
        %979 = vmatprep.subr.mxu0 0.0
        %980 = vmatpush1.msra.mxu0 0.0
        %981 = vmatprep.subr.mxu0 0.0
        %982 = vmatpush1.msra.mxu0 0.0
        %983 = vmatprep.subr.mxu0 0.0
        %984 = vmatpush1.msra.mxu0 0.0
        %985 = vmatprep.subr.mxu0 0.0
        %986 = vmatpush1.msra.mxu0 0.0
        %987 = vmatprep.subr.mxu0 0.0
        %988 = vmatpush1.msra.mxu0 0.0
        %989 = vmatprep.subr.mxu0 0.0
        %990 = vmatpush1.msra.mxu0 0.0
        %991 = vmatprep.subr.mxu0 0.0
        %992 = vmatpush1.msra.mxu0 0.0
        %993 = vmatprep.subr.mxu0 0.0
        %994 = vmatpush1.msra.mxu0 0.0
        %995 = vmatprep.subr.mxu0 0.0
        %996 = vmatpush1.msra.mxu0 0.0
        %997 = vmatprep.subr.mxu0 0.0
        %998 = vmatpush1.msra.mxu0 0.0
        %999 = vmatprep.subr.mxu0 0.0
        %1000 = vmatpush1.msra.mxu0 0.0
        %1001 = vmatprep.mubr.f32.mxu0 0.0
        %1002 = vmatmul.mubr.f32.gmra.mrb[0].mxu0 %v514
        %v1003 = vpop.f32.mrb[0].mxu0
        %v1004 = vadd.f32 %v500, %v1003
        %v1005 = vpop.f32.mrb[0].mxu0
        %v1006 = vadd.f32 %v500, %v1005
        %1007 = vmatprep.mubr.f32.mxu0 0.0
        %1008 = vmatmul.mubr.f32.gmra.mrb[0].mxu0 %v517
        %v1009 = vpop.f32.mrb[0].mxu0
        %v1010 = vadd.f32 %v505, %v1009
        %v1011 = vpop.f32.mrb[0].mxu0
        %v1012 = vadd.f32 %v505, %v1011
        %1013 = vmatprep.mubr.f32.mxu0 0.0
        %1014 = vmatmul.mubr.f32.gmra.mrb[0].mxu0 %v520
        %v1015 = vpop.f32.mrb[0].mxu0
        %v1016 = vadd.f32 %v510, %v1015
        %v1017 = vpop.f32.mrb[0].mxu0
        %v1018 = vadd.f32 %v510, %v1017
        %1019 = vdwg.mxu0
        %1020 = vmatprep.subr.mxu0 %v411
        %1021 = vmatpush1.msra.mxu0 %v410
        %1022 = vmatprep.subr.mxu0 %v427
        %1023 = vmatpush1.msra.mxu0 %v426
        %1024 = vmatprep.subr.mxu0 %v443
        %1025 = vmatpush1.msra.mxu0 %v442
        %1026 = vmatprep.subr.mxu0 %v459
        %1027 = vmatpush1.msra.mxu0 %v458
        %1028 = vmatprep.subr.mxu0 %v475
        %1029 = vmatpush1.msra.mxu0 %v474
        %1030 = vmatprep.subr.mxu0 %v491
        %1031 = vmatpush1.msra.mxu0 %v490
        %1032 = vmatprep.subr.mxu0 0.0
        %1033 = vmatpush1.msra.mxu0 0.0
        %1034 = vmatprep.subr.mxu0 0.0
        %1035 = vmatpush1.msra.mxu0 0.0
        %1036 = vmatprep.subr.mxu0 0.0
        %1037 = vmatpush1.msra.mxu0 0.0
        %1038 = vmatprep.subr.mxu0 0.0
        %1039 = vmatpush1.msra.mxu0 0.0
        %1040 = vmatprep.subr.mxu0 0.0
        %1041 = vmatpush1.msra.mxu0 0.0
        %1042 = vmatprep.subr.mxu0 0.0
        %1043 = vmatpush1.msra.mxu0 0.0
        %1044 = vmatprep.subr.mxu0 0.0
        %1045 = vmatpush1.msra.mxu0 0.0
        %1046 = vmatprep.subr.mxu0 0.0
        %1047 = vmatpush1.msra.mxu0 0.0
        %1048 = vmatprep.subr.mxu0 0.0
        %1049 = vmatpush1.msra.mxu0 0.0
        %1050 = vmatprep.subr.mxu0 0.0
        %1051 = vmatpush1.msra.mxu0 0.0
        %1052 = vmatprep.subr.mxu0 0.0
        %1053 = vmatpush1.msra.mxu0 0.0
        %1054 = vmatprep.subr.mxu0 0.0
        %1055 = vmatpush1.msra.mxu0 0.0
        %1056 = vmatprep.subr.mxu0 0.0
        %1057 = vmatpush1.msra.mxu0 0.0
        %1058 = vmatprep.subr.mxu0 0.0
        %1059 = vmatpush1.msra.mxu0 0.0
        %1060 = vmatprep.subr.mxu0 0.0
        %1061 = vmatpush1.msra.mxu0 0.0
        %1062 = vmatprep.subr.mxu0 0.0
        %1063 = vmatpush1.msra.mxu0 0.0
        %1064 = vmatprep.subr.mxu0 0.0
        %1065 = vmatpush1.msra.mxu0 0.0
        %1066 = vmatprep.subr.mxu0 0.0
        %1067 = vmatpush1.msra.mxu0 0.0
        %1068 = vmatprep.subr.mxu0 0.0
        %1069 = vmatpush1.msra.mxu0 0.0
        %1070 = vmatprep.subr.mxu0 0.0
        %1071 = vmatpush1.msra.mxu0 0.0
        %1072 = vmatprep.subr.mxu0 0.0
        %1073 = vmatpush1.msra.mxu0 0.0
        %1074 = vmatprep.subr.mxu0 0.0
        %1075 = vmatpush1.msra.mxu0 0.0
        %1076 = vmatprep.subr.mxu0 0.0
        %1077 = vmatpush1.msra.mxu0 0.0
        %1078 = vmatprep.subr.mxu0 0.0
        %1079 = vmatpush1.msra.mxu0 0.0
        %1080 = vmatprep.subr.mxu0 0.0
        %1081 = vmatpush1.msra.mxu0 0.0
        %1082 = vmatprep.subr.mxu0 0.0
        %1083 = vmatpush1.msra.mxu0 0.0
        %1084 = vmatprep.mubr.f32.mxu0 0.0
        %1085 = vmatmul.mubr.f32.gmra.mrb[0].mxu0 %v514
        %v1086 = vpop.f32.mrb[0].mxu0
        %v1087 = vadd.f32 %v500, %v1086
        %v1088 = vpop.f32.mrb[0].mxu0
        %v1089 = vadd.f32 %v500, %v1088
        %1090 = vmatprep.mubr.f32.mxu0 0.0
        %1091 = vmatmul.mubr.f32.gmra.mrb[0].mxu0 %v517
        %v1092 = vpop.f32.mrb[0].mxu0
        %v1093 = vadd.f32 %v505, %v1092
        %v1094 = vpop.f32.mrb[0].mxu0
        %v1095 = vadd.f32 %v505, %v1094
        %1096 = vmatprep.mubr.f32.mxu0 0.0
        %1097 = vmatmul.mubr.f32.gmra.mrb[0].mxu0 %v520
        %v1098 = vpop.f32.mrb[0].mxu0
        %v1099 = vadd.f32 %v510, %v1098
        %v1100 = vpop.f32.mrb[0].mxu0
        %v1101 = vadd.f32 %v510, %v1100
        %1102 = vdwg.mxu0
        %1103 = vmatprep.subr.mxu0 %v413
        %1104 = vmatpush1.msra.mxu0 %v412
        %1105 = vmatprep.subr.mxu0 %v429
        %1106 = vmatpush1.msra.mxu0 %v428
        %1107 = vmatprep.subr.mxu0 %v445
        %1108 = vmatpush1.msra.mxu0 %v444
        %1109 = vmatprep.subr.mxu0 %v461
        %1110 = vmatpush1.msra.mxu0 %v460
        %1111 = vmatprep.subr.mxu0 %v477
        %1112 = vmatpush1.msra.mxu0 %v476
        %1113 = vmatprep.subr.mxu0 %v493
        %1114 = vmatpush1.msra.mxu0 %v492
        %1115 = vmatprep.subr.mxu0 0.0
        %1116 = vmatpush1.msra.mxu0 0.0
        %1117 = vmatprep.subr.mxu0 0.0
        %1118 = vmatpush1.msra.mxu0 0.0
        %1119 = vmatprep.subr.mxu0 0.0
        %1120 = vmatpush1.msra.mxu0 0.0
        %1121 = vmatprep.subr.mxu0 0.0
        %1122 = vmatpush1.msra.mxu0 0.0
        %1123 = vmatprep.subr.mxu0 0.0
        %1124 = vmatpush1.msra.mxu0 0.0
        %1125 = vmatprep.subr.mxu0 0.0
        %1126 = vmatpush1.msra.mxu0 0.0
        %1127 = vmatprep.subr.mxu0 0.0
        %1128 = vmatpush1.msra.mxu0 0.0
        %1129 = vmatprep.subr.mxu0 0.0
        %1130 = vmatpush1.msra.mxu0 0.0
        %1131 = vmatprep.subr.mxu0 0.0
        %1132 = vmatpush1.msra.mxu0 0.0
        %1133 = vmatprep.subr.mxu0 0.0
        %1134 = vmatpush1.msra.mxu0 0.0
        %1135 = vmatprep.subr.mxu0 0.0
        %1136 = vmatpush1.msra.mxu0 0.0
        %1137 = vmatprep.subr.mxu0 0.0
        %1138 = vmatpush1.msra.mxu0 0.0
        %1139 = vmatprep.subr.mxu0 0.0
        %1140 = vmatpush1.msra.mxu0 0.0
        %1141 = vmatprep.subr.mxu0 0.0
        %1142 = vmatpush1.msra.mxu0 0.0
        %1143 = vmatprep.subr.mxu0 0.0
        %1144 = vmatpush1.msra.mxu0 0.0
        %1145 = vmatprep.subr.mxu0 0.0
        %1146 = vmatpush1.msra.mxu0 0.0
        %1147 = vmatprep.subr.mxu0 0.0
        %1148 = vmatpush1.msra.mxu0 0.0
        %1149 = vmatprep.subr.mxu0 0.0
        %1150 = vmatpush1.msra.mxu0 0.0
        %1151 = vmatprep.subr.mxu0 0.0
        %1152 = vmatpush1.msra.mxu0 0.0
        %1153 = vmatprep.subr.mxu0 0.0
        %1154 = vmatpush1.msra.mxu0 0.0
        %1155 = vmatprep.subr.mxu0 0.0
        %1156 = vmatpush1.msra.mxu0 0.0
        %1157 = vmatprep.subr.mxu0 0.0
        %1158 = vmatpush1.msra.mxu0 0.0
        %1159 = vmatprep.subr.mxu0 0.0
        %1160 = vmatpush1.msra.mxu0 0.0
        %1161 = vmatprep.subr.mxu0 0.0
        %1162 = vmatpush1.msra.mxu0 0.0
        %1163 = vmatprep.subr.mxu0 0.0
        %1164 = vmatpush1.msra.mxu0 0.0
        %1165 = vmatprep.subr.mxu0 0.0
        %1166 = vmatpush1.msra.mxu0 0.0
        %1167 = vmatprep.mubr.f32.mxu0 0.0
        %1168 = vmatmul.mubr.f32.gmra.mrb[0].mxu0 %v514
        %v1169 = vpop.f32.mrb[0].mxu0
        %v1170 = vadd.f32 %v500, %v1169
        %v1171 = vpop.f32.mrb[0].mxu0
        %v1172 = vadd.f32 %v500, %v1171
        %1173 = vmatprep.mubr.f32.mxu0 0.0
        %1174 = vmatmul.mubr.f32.gmra.mrb[0].mxu0 %v517
        %v1175 = vpop.f32.mrb[0].mxu0
        %v1176 = vadd.f32 %v505, %v1175
        %v1177 = vpop.f32.mrb[0].mxu0
        %v1178 = vadd.f32 %v505, %v1177
        %1179 = vmatprep.mubr.f32.mxu0 0.0
        %1180 = vmatmul.mubr.f32.gmra.mrb[0].mxu0 %v520
        %v1181 = vpop.f32.mrb[0].mxu0
        %v1182 = vadd.f32 %v510, %v1181
        %v1183 = vpop.f32.mrb[0].mxu0
        %v1184 = vadd.f32 %v510, %v1183
        %1185 = vdwg.mxu0
        %v1186 = vmax.f32 %v589, 0.0
        %v1187 = vmax.f32 %v591, 0.0
        %v1188 = vmax.f32 %v672, 0.0
        %v1189 = vmax.f32 %v674, 0.0
        %v1190 = vmax.f32 %v755, 0.0
        %v1191 = vmax.f32 %v757, 0.0
        %v1192 = vmax.f32 %v838, 0.0
        %v1193 = vmax.f32 %v840, 0.0
        %v1194 = vmax.f32 %v921, 0.0
        %v1195 = vmax.f32 %v923, 0.0
        %v1196 = vmax.f32 %v1004, 0.0
        %v1197 = vmax.f32 %v1006, 0.0
        %v1198 = vmax.f32 %v1087, 0.0
        %v1199 = vmax.f32 %v1089, 0.0
        %v1200 = vmax.f32 %v1170, 0.0
        %v1201 = vmax.f32 %v1172, 0.0
        %v1202 = vmax.f32 %v595, 0.0
        %v1203 = vmax.f32 %v597, 0.0
        %v1204 = vmax.f32 %v678, 0.0
        %v1205 = vmax.f32 %v680, 0.0
        %v1206 = vmax.f32 %v761, 0.0
        %v1207 = vmax.f32 %v763, 0.0
        %v1208 = vmax.f32 %v844, 0.0
        %v1209 = vmax.f32 %v846, 0.0
        %v1210 = vmax.f32 %v927, 0.0
        %v1211 = vmax.f32 %v929, 0.0
        %v1212 = vmax.f32 %v1010, 0.0
        %v1213 = vmax.f32 %v1012, 0.0
        %v1214 = vmax.f32 %v1093, 0.0
        %v1215 = vmax.f32 %v1095, 0.0
        %v1216 = vmax.f32 %v1176, 0.0
        %v1217 = vmax.f32 %v1178, 0.0
        %v1218 = vmax.f32 %v601, 0.0
        %v1219 = vmax.f32 %v603, 0.0
        %v1220 = vmax.f32 %v684, 0.0
        %v1221 = vmax.f32 %v686, 0.0
        %v1222 = vmax.f32 %v767, 0.0
        %v1223 = vmax.f32 %v769, 0.0
        %v1224 = vmax.f32 %v850, 0.0
        %v1225 = vmax.f32 %v852, 0.0
        %v1226 = vmax.f32 %v933, 0.0
        %v1227 = vmax.f32 %v935, 0.0
        %v1228 = vmax.f32 %v1016, 0.0
        %v1229 = vmax.f32 %v1018, 0.0
        %v1230 = vmax.f32 %v1099, 0.0
        %v1231 = vmax.f32 %v1101, 0.0
        %v1232 = vmax.f32 %v1182, 0.0
        %v1233 = vmax.f32 %v1184, 0.0
        %1234 = vst [vmem:[%s392] sm:$0xff] %v1186
        %1235 = vst [vmem:[%s392 + $0x8] sm:$0xff] %v1187
        %1236 = vst [vmem:[%s392 + $0x10] sm:$0xff] %v1188
        %1237 = vst [vmem:[%s392 + $0x18] sm:$0xff] %v1189
        %1238 = vst [vmem:[%s392 + $0x20] sm:$0xff] %v1190
        %1239 = vst [vmem:[%s392 + $0x28] sm:$0xff] %v1191
        %1240 = vst [vmem:[%s392 + $0x30] sm:$0xff] %v1192
        %1241 = vst [vmem:[%s392 + $0x38] sm:$0xff] %v1193
        %1242 = vst [vmem:[%s392 + $0x40] sm:$0xff] %v1194
        %1243 = vst [vmem:[%s392 + $0x48] sm:$0xff] %v1195
        %1244 = vst [vmem:[%s392 + $0x50] sm:$0xff] %v1196
        %1245 = vst [vmem:[%s392 + $0x58] sm:$0xff] %v1197
        %1246 = vst [vmem:[%s392 + $0x60] sm:$0xff] %v1198
        %1247 = vst [vmem:[%s392 + $0x68] sm:$0xff] %v1199
        %1248 = vst [vmem:[%s392 + $0x70] sm:$0xff] %v1200
        %1249 = vst [vmem:[%s392 + $0x78] sm:$0xff] %v1201
        %1250 = vst [vmem:[%s392 + $0x80] sm:$0xff] %v1202
        %1251 = vst [vmem:[%s392 + $0x88] sm:$0xff] %v1203
        %1252 = vst [vmem:[%s392 + $0x90] sm:$0xff] %v1204
        %1253 = vst [vmem:[%s392 + $0x98] sm:$0xff] %v1205
        %1254 = vst [vmem:[%s392 + $0xa0] sm:$0xff] %v1206
        %1255 = vst [vmem:[%s392 + $0xa8] sm:$0xff] %v1207
        %1256 = vst [vmem:[%s392 + $0xb0] sm:$0xff] %v1208
        %1257 = vst [vmem:[%s392 + $0xb8] sm:$0xff] %v1209
        %1258 = vst [vmem:[%s392 + $0xc0] sm:$0xff] %v1210
        %1259 = vst [vmem:[%s392 + $0xc8] sm:$0xff] %v1211
        %1260 = vst [vmem:[%s392 + $0xd0] sm:$0xff] %v1212
        %1261 = vst [vmem:[%s392 + $0xd8] sm:$0xff] %v1213
        %1262 = vst [vmem:[%s392 + $0xe0] sm:$0xff] %v1214
        %1263 = vst [vmem:[%s392 + $0xe8] sm:$0xff] %v1215
        %1264 = vst [vmem:[%s392 + $0xf0] sm:$0xff] %v1216
        %1265 = vst [vmem:[%s392 + $0xf8] sm:$0xff] %v1217
        %1266 = vst [vmem:[%s392 + $0x100] sm:$0xff] %v1218
        %1267 = vst [vmem:[%s392 + $0x108] sm:$0xff] %v1219
        %1268 = vst [vmem:[%s392 + $0x110] sm:$0xff] %v1220
        %1269 = vst [vmem:[%s392 + $0x118] sm:$0xff] %v1221
        %1270 = vst [vmem:[%s392 + $0x120] sm:$0xff] %v1222
        %1271 = vst [vmem:[%s392 + $0x128] sm:$0xff] %v1223
        %1272 = vst [vmem:[%s392 + $0x130] sm:$0xff] %v1224
        %1273 = vst [vmem:[%s392 + $0x138] sm:$0xff] %v1225
        %1274 = vst [vmem:[%s392 + $0x140] sm:$0xff] %v1226
        %1275 = vst [vmem:[%s392 + $0x148] sm:$0xff] %v1227
        %1276 = vst [vmem:[%s392 + $0x150] sm:$0xff] %v1228
        %1277 = vst [vmem:[%s392 + $0x158] sm:$0xff] %v1229
        %1278 = vst [vmem:[%s392 + $0x160] sm:$0xff] %v1230
        %1279 = vst [vmem:[%s392 + $0x168] sm:$0xff] %v1231
        %1280 = vst [vmem:[%s392 + $0x170] sm:$0xff] %v1232
        %1281 = vst [vmem:[%s392 + $0x178] sm:$0xff] %v1233
        %s1282 = sand.u32 %s106, 1
        %s1283 = sand.u32 %s106, 1
        %s1284 = smul.addr %s1283, 384
        %s1285 = scalar_lea.vmem [#allocation3], %s1284
        // Predicated region
        $region56: #{_lambda_.1} parent=50 // pred_check
          %p1286 = pneg %p116
        $region57: #{_lambda_.1} parent=50 // pred_check_branch
          %1288 = sbr.rel (%p1286) target = $region59
        $region58: #{_lambda_.1} parent=50 // pred_region
          %s1289 = smul.u32 16, %s19
          %s1290 = smul.addr %s18, 96
          %s1291 = sadd.s32 %s1289, %s1290
          %s1292 = smul.addr %s1291, 8
          %s1293 = scalar_lea.vmem %s3, %s1292
          // Predicated region
          $region60: #{_lambda_.1} parent=58 // pred_check
            _
          $region61: #{_lambda_.1} parent=58 // pred_check_branch
            %1295 = sbr.rel (0) target = $region63
          $region62: #{_lambda_.1} parent=58 // pred_region
            // Predicated region
            $region64: #{_lambda_.1} parent=62 // pred_check
              _
            $region65: #{_lambda_.1} parent=62 // pred_check_branch
              %1297 = sbr.rel (0) target = $region67
            $region66: #{_lambda_.1} parent=62 // pred_region
              loop: start=0, step=1, limit=1
              $region68: #{_lambda_.1} parent=66 // loop_pre_header
                _
              $region69: #{_lambda_.1} parent=66 // loop_header
                %s1299 = sphi 0, %s1303
                %p1300 = scmp.ge.s32.totalorder %s1299, 1
                %s1304 = sphi %s1285, %s1285
                %s1305 = sphi %s1293, %s1293
              $region70: #{_lambda_.1} parent=66 // loop_header_branch
                %1302 = sbr.rel (%p1300) target = $region74
              $region71: #{_lambda_.1} parent=66 // loop_body
                %v1306 = vld [vmem:[%s1304] sm:$0xff]
                %1307 = vst [vmem:[%s1305] sm:$0xff] %v1306
                %v1308 = vld [vmem:[%s1304 + $0x8] sm:$0xff]
                %1309 = vst [vmem:[%s1305 + $0x8] sm:$0xff] %v1308
                %v1310 = vld [vmem:[%s1304 + $0x10] sm:$0xff]
                %1311 = vst [vmem:[%s1305 + $0x10] sm:$0xff] %v1310
                %v1312 = vld [vmem:[%s1304 + $0x18] sm:$0xff]
                %1313 = vst [vmem:[%s1305 + $0x18] sm:$0xff] %v1312
                %v1314 = vld [vmem:[%s1304 + $0x20] sm:$0xff]
                %1315 = vst [vmem:[%s1305 + $0x20] sm:$0xff] %v1314
                %v1316 = vld [vmem:[%s1304 + $0x28] sm:$0xff]
                %1317 = vst [vmem:[%s1305 + $0x28] sm:$0xff] %v1316
                %v1318 = vld [vmem:[%s1304 + $0x30] sm:$0xff]
                %1319 = vst [vmem:[%s1305 + $0x30] sm:$0xff] %v1318
                %v1320 = vld [vmem:[%s1304 + $0x38] sm:$0xff]
                %1321 = vst [vmem:[%s1305 + $0x38] sm:$0xff] %v1320
                %v1322 = vld [vmem:[%s1304 + $0x40] sm:$0xff]
                %1323 = vst [vmem:[%s1305 + $0x40] sm:$0xff] %v1322
                %v1324 = vld [vmem:[%s1304 + $0x48] sm:$0xff]
                %1325 = vst [vmem:[%s1305 + $0x48] sm:$0xff] %v1324
                %v1326 = vld [vmem:[%s1304 + $0x50] sm:$0xff]
                %1327 = vst [vmem:[%s1305 + $0x50] sm:$0xff] %v1326
                %v1328 = vld [vmem:[%s1304 + $0x58] sm:$0xff]
                %1329 = vst [vmem:[%s1305 + $0x58] sm:$0xff] %v1328
                %v1330 = vld [vmem:[%s1304 + $0x60] sm:$0xff]
                %1331 = vst [vmem:[%s1305 + $0x60] sm:$0xff] %v1330
                %v1332 = vld [vmem:[%s1304 + $0x68] sm:$0xff]
                %1333 = vst [vmem:[%s1305 + $0x68] sm:$0xff] %v1332
                %v1334 = vld [vmem:[%s1304 + $0x70] sm:$0xff]
                %1335 = vst [vmem:[%s1305 + $0x70] sm:$0xff] %v1334
                %v1336 = vld [vmem:[%s1304 + $0x78] sm:$0xff]
                %1337 = vst [vmem:[%s1305 + $0x78] sm:$0xff] %v1336
                %v1338 = vld [vmem:[%s1304 + $0x80] sm:$0xff]
                %1339 = vst [vmem:[%s1305 + $0x100] sm:$0xff] %v1338
                %v1340 = vld [vmem:[%s1304 + $0x88] sm:$0xff]
                %1341 = vst [vmem:[%s1305 + $0x108] sm:$0xff] %v1340
                %v1342 = vld [vmem:[%s1304 + $0x90] sm:$0xff]
                %1343 = vst [vmem:[%s1305 + $0x110] sm:$0xff] %v1342
                %v1344 = vld [vmem:[%s1304 + $0x98] sm:$0xff]
                %1345 = vst [vmem:[%s1305 + $0x118] sm:$0xff] %v1344
                %v1346 = vld [vmem:[%s1304 + $0xa0] sm:$0xff]
                %1347 = vst [vmem:[%s1305 + $0x120] sm:$0xff] %v1346
                %v1348 = vld [vmem:[%s1304 + $0xa8] sm:$0xff]
                %1349 = vst [vmem:[%s1305 + $0x128] sm:$0xff] %v1348
                %v1350 = vld [vmem:[%s1304 + $0xb0] sm:$0xff]
                %1351 = vst [vmem:[%s1305 + $0x130] sm:$0xff] %v1350
                %v1352 = vld [vmem:[%s1304 + $0xb8] sm:$0xff]
                %1353 = vst [vmem:[%s1305 + $0x138] sm:$0xff] %v1352
                %v1354 = vld [vmem:[%s1304 + $0xc0] sm:$0xff]
                %1355 = vst [vmem:[%s1305 + $0x140] sm:$0xff] %v1354
                %v1356 = vld [vmem:[%s1304 + $0xc8] sm:$0xff]
                %1357 = vst [vmem:[%s1305 + $0x148] sm:$0xff] %v1356
                %v1358 = vld [vmem:[%s1304 + $0xd0] sm:$0xff]
                %1359 = vst [vmem:[%s1305 + $0x150] sm:$0xff] %v1358
                %v1360 = vld [vmem:[%s1304 + $0xd8] sm:$0xff]
                %1361 = vst [vmem:[%s1305 + $0x158] sm:$0xff] %v1360
                %v1362 = vld [vmem:[%s1304 + $0xe0] sm:$0xff]
                %1363 = vst [vmem:[%s1305 + $0x160] sm:$0xff] %v1362
                %v1364 = vld [vmem:[%s1304 + $0xe8] sm:$0xff]
                %1365 = vst [vmem:[%s1305 + $0x168] sm:$0xff] %v1364
                %v1366 = vld [vmem:[%s1304 + $0xf0] sm:$0xff]
                %1367 = vst [vmem:[%s1305 + $0x170] sm:$0xff] %v1366
                %v1368 = vld [vmem:[%s1304 + $0xf8] sm:$0xff]
                %1369 = vst [vmem:[%s1305 + $0x178] sm:$0xff] %v1368
                %v1370 = vld [vmem:[%s1304 + $0x100] sm:$0xff]
                %1371 = vst [vmem:[%s1305 + $0x200] sm:$0xff] %v1370
                %v1372 = vld [vmem:[%s1304 + $0x108] sm:$0xff]
                %1373 = vst [vmem:[%s1305 + $0x208] sm:$0xff] %v1372
                %v1374 = vld [vmem:[%s1304 + $0x110] sm:$0xff]
                %1375 = vst [vmem:[%s1305 + $0x210] sm:$0xff] %v1374
                %v1376 = vld [vmem:[%s1304 + $0x118] sm:$0xff]
                %1377 = vst [vmem:[%s1305 + $0x218] sm:$0xff] %v1376
                %v1378 = vld [vmem:[%s1304 + $0x120] sm:$0xff]
                %1379 = vst [vmem:[%s1305 + $0x220] sm:$0xff] %v1378
                %v1380 = vld [vmem:[%s1304 + $0x128] sm:$0xff]
                %1381 = vst [vmem:[%s1305 + $0x228] sm:$0xff] %v1380
                %v1382 = vld [vmem:[%s1304 + $0x130] sm:$0xff]
                %1383 = vst [vmem:[%s1305 + $0x230] sm:$0xff] %v1382
                %v1384 = vld [vmem:[%s1304 + $0x138] sm:$0xff]
                %1385 = vst [vmem:[%s1305 + $0x238] sm:$0xff] %v1384
                %v1386 = vld [vmem:[%s1304 + $0x140] sm:$0xff]
                %1387 = vst [vmem:[%s1305 + $0x240] sm:$0xff] %v1386
                %v1388 = vld [vmem:[%s1304 + $0x148] sm:$0xff]
                %1389 = vst [vmem:[%s1305 + $0x248] sm:$0xff] %v1388
                %v1390 = vld [vmem:[%s1304 + $0x150] sm:$0xff]
                %1391 = vst [vmem:[%s1305 + $0x250] sm:$0xff] %v1390
                %v1392 = vld [vmem:[%s1304 + $0x158] sm:$0xff]
                %1393 = vst [vmem:[%s1305 + $0x258] sm:$0xff] %v1392
                %v1394 = vld [vmem:[%s1304 + $0x160] sm:$0xff]
                %1395 = vst [vmem:[%s1305 + $0x260] sm:$0xff] %v1394
                %v1396 = vld [vmem:[%s1304 + $0x168] sm:$0xff]
                %1397 = vst [vmem:[%s1305 + $0x268] sm:$0xff] %v1396
                %v1398 = vld [vmem:[%s1304 + $0x170] sm:$0xff]
                %1399 = vst [vmem:[%s1305 + $0x270] sm:$0xff] %v1398
                %v1400 = vld [vmem:[%s1304 + $0x178] sm:$0xff]
                %1401 = vst [vmem:[%s1305 + $0x278] sm:$0xff] %v1400
              $region72: #{_lambda_.1} parent=66 // loop_footer
                %s1303 = sadd.s32 1, %s1299
              $region73: #{_lambda_.1} parent=66 // loop_footer_branch
                %1298 = sbr.rel target = $region69
              $region74: #{_lambda_.1} parent=66 // loop_exit
                _
            $region67: #{_lambda_.1} parent=62 // pred_fallthru
              _
            // Predicated region
            $region75: #{_lambda_.1} parent=62 // pred_check
              _
            $region76: #{_lambda_.1} parent=62 // pred_check_branch
              %1403 = sbr.rel target = $region78
            $region77: #{_lambda_.1} parent=62 // pred_region
              _
            $region78: #{_lambda_.1} parent=62 // pred_fallthru
              _
          $region63: #{_lambda_.1} parent=58 // pred_fallthru
            _
          %1404 = vnop
        $region59: #{_lambda_.1} parent=50 // pred_fallthru
          _
      $region51: #{_lambda_.1} parent=5 // pred_fallthru
        _
      %p1405 = scmp.le.s32.totalorder 2, %s9
      // Predicated region
      $region79: #{_lambda_.1} parent=5 // pred_check
        %p1406 = pneg %p1405
      $region80: #{_lambda_.1} parent=5 // pred_check_branch
        %1408 = sbr.rel (%p1406) target = $region82
      $region81: #{_lambda_.1} parent=5 // pred_region
        %s1409 = ssub.s32 %s9, 2
        // Predicated region
        $region83: #{_lambda_.1} parent=81 // pred_check
          %p1410 = pneg %p122
        $region84: #{_lambda_.1} parent=81 // pred_check_branch
          %1412 = sbr.rel (%p1410) target = $region86
        $region85: #{_lambda_.1} parent=81 // pred_region
          %s1413 = sand.u32 %s107, 1
          %s1414 = sand.u32 %s107, 1
          %s1415 = smul.addr %s1414, 384
          %s1416 = scalar_lea.vmem [#allocation3], %s1415
        $region86: #{_lambda_.1} parent=81 // pred_fallthru
          _
      $region82: #{_lambda_.1} parent=5 // pred_fallthru
        _
    $region6: #{_lambda_.1} parent=1 // loop_footer
      %s13 = sadd.s32 1, %s9
    $region7: #{_lambda_.1} parent=1 // loop_footer_branch
      %8 = sbr.rel target = $region3
    $region8: #{_lambda_.1} parent=1 // loop_exit
      _

</llo_original>
